<compile_context>
chip_gen: v7x
topology: tpu7x:2x2x1
jax: 0.10.0
libtpu: 0.0.40
codegen_flags: <defaults>
</compile_context>

<pallas_src>
import functools
import math

import jax
import jax.numpy as jnp
from jax import lax
from jax.experimental import pallas as pl
from jax.experimental.pallas import tpu as pltpu

# ------------------------- small synthetic config -------------------------
HIDDEN = 128
NUM_HEADS = 2          # == num_local_heads (tp_size = 1)
QK_NOPE = 64
QK_ROPE = 32
QK_HEAD = QK_NOPE + QK_ROPE
V_HEAD = 64
Q_LORA = 64
KV_LORA = 128
SEQ = 8
RMS_EPS = 1e-6
ROPE_THETA = 10000.0
ROPE_SCALING = dict(
    factor=2.0, beta_fast=32.0, beta_slow=1.0,
    mscale=1.0, mscale_all_dim=1.0,
    original_max_position_embeddings=512,
)

# attention scaling = qk_head_dim**-0.5 * yarn_mscale**2  (as in the module __init__)
_MSCALE_ATTN = 0.1 * ROPE_SCALING["mscale_all_dim"] * math.log(ROPE_SCALING["factor"]) + 1.0
SCALING = (QK_HEAD ** -0.5) * _MSCALE_ATTN * _MSCALE_ATTN

_COMPILER_PARAMS = pltpu.CompilerParams(
    dimension_semantics=("parallel",),
    vmem_limit_bytes=32 * 1024 * 1024,   # safe on v5e/v6e/v7x; tiny tiles here
)


# ------------------------------ in-kernel helpers ------------------------------
def _rms(x, w, eps):
    """RMSNorm in f32. x: [M, D] f32, w: [1, D] f32."""
    var = jnp.mean(x * x, axis=-1, keepdims=True)
    return x * lax.rsqrt(var + eps) * w


# ------------------------------ kernel 1: fused projections + RoPE ------------------------------
def _proj_kernel(x_ref, wqa_ref, qln_ref, wqbn_ref, wqbp_ref,
                 wkva_ref, wkpe_ref, kvln_ref, wkvbn_ref, wkvbv_ref,
                 cos_ref, sin_ref,
                 qn_ref, qp_ref, kn_ref, kp_ref, v_ref,
                 *, eps, rope, heads):
    x = x_ref[...]                                                    # [tm, hidden] bf16

    # q path: q_a_proj -> q_a_layernorm -> q_b_proj (scale pre-folded into w_qb*)
    q_lat = jnp.dot(x, wqa_ref[...], preferred_element_type=jnp.float32)
    q_n = _rms(q_lat, qln_ref[...], eps).astype(jnp.bfloat16)
    qn_ref[...] = jnp.dot(q_n, wqbn_ref[...],
                          preferred_element_type=jnp.float32).astype(qn_ref.dtype)
    q_pe = jnp.dot(q_n, wqbp_ref[...], preferred_element_type=jnp.float32)

    # kv path: kv_a_proj_with_mqa -> split -> kv_a_layernorm -> kv_b_proj
    kv_lat = jnp.dot(x, wkva_ref[...], preferred_element_type=jnp.float32)
    k_pe = jnp.dot(x, wkpe_ref[...], preferred_element_type=jnp.float32)
    kv_n = _rms(kv_lat, kvln_ref[...], eps).astype(jnp.bfloat16)
    kn_ref[...] = jnp.dot(kv_n, wkvbn_ref[...],
                          preferred_element_type=jnp.float32).astype(kn_ref.dtype)
    v_ref[...] = jnp.dot(kv_n, wkvbv_ref[...],
                         preferred_element_type=jnp.float32).astype(v_ref.dtype)

    # RoPE epilogue (rope weight columns pre-de-interleaved -> split-half rotation, f32 math)
    cos = cos_ref[...]
    sin = sin_ref[...]
    r2 = rope // 2

    def rot(xp):                                                      # [tm, rope] f32
        x1 = xp[:, :r2]
        x2 = xp[:, r2:]
        return jnp.concatenate([x1 * cos - x2 * sin, x2 * cos + x1 * sin], axis=-1)

    qp_rot = jnp.concatenate(
        [rot(q_pe[:, h * rope:(h + 1) * rope]) for h in range(heads)], axis=-1)
    qp_ref[...] = qp_rot.astype(qp_ref.dtype)
    kp_ref[...] = rot(k_pe).astype(kp_ref.dtype)


def fused_qkv_proj(x_bf16, cos, sin, p, *, eps=RMS_EPS):
    t = x_bf16.shape[0]
    tm = t                      # one token tile at demo size; grid scales over T for long seqs
    nt = t // tm
    full = lambda i: (0, 0)
    tile = lambda i: (i, 0)
    kernel = functools.partial(_proj_kernel, eps=eps, rope=QK_ROPE, heads=NUM_HEADS)
    out_shapes = (
        jax.ShapeDtypeStruct((t, NUM_HEADS * QK_NOPE), jnp.bfloat16),   # q_nope
        jax.ShapeDtypeStruct((t, NUM_HEADS * QK_ROPE), jnp.bfloat16),   # q_pe (roped)
        jax.ShapeDtypeStruct((t, NUM_HEADS * QK_NOPE), jnp.bfloat16),   # k_nope
        jax.ShapeDtypeStruct((t, QK_ROPE), jnp.bfloat16),               # k_pe (roped, shared)
        jax.ShapeDtypeStruct((t, NUM_HEADS * V_HEAD), jnp.bfloat16),    # v
    )
    return pl.pallas_call(
        kernel,
        out_shape=out_shapes,
        grid=(nt,),
        in_specs=[
            pl.BlockSpec((tm, HIDDEN), tile),
            pl.BlockSpec((HIDDEN, Q_LORA), full),
            pl.BlockSpec((1, Q_LORA), full),
            pl.BlockSpec((Q_LORA, NUM_HEADS * QK_NOPE), full),
            pl.BlockSpec((Q_LORA, NUM_HEADS * QK_ROPE), full),
            pl.BlockSpec((HIDDEN, KV_LORA), full),
            pl.BlockSpec((HIDDEN, QK_ROPE), full),
            pl.BlockSpec((1, KV_LORA), full),
            pl.BlockSpec((KV_LORA, NUM_HEADS * QK_NOPE), full),
            pl.BlockSpec((KV_LORA, NUM_HEADS * V_HEAD), full),
            pl.BlockSpec((tm, QK_ROPE // 2), tile),
            pl.BlockSpec((tm, QK_ROPE // 2), tile),
        ],
        out_specs=(
            pl.BlockSpec((tm, NUM_HEADS * QK_NOPE), tile),
            pl.BlockSpec((tm, NUM_HEADS * QK_ROPE), tile),
            pl.BlockSpec((tm, NUM_HEADS * QK_NOPE), tile),
            pl.BlockSpec((tm, QK_ROPE), tile),
            pl.BlockSpec((tm, NUM_HEADS * V_HEAD), tile),
        ),
        compiler_params=_COMPILER_PARAMS,
    )(x_bf16, p["w_qa"], p["q_ln"], p["w_qb_nope"], p["w_qb_pe"],
      p["w_kva"], p["w_kpe"], p["kv_ln"], p["w_kvb_nope"], p["w_kvb_v"],
      cos, sin)


# ------------------------------ kernel 2: attention + o_proj ------------------------------
def _attn_o_kernel(qn_ref, qp_ref, kn_ref, kp_ref, v_ref, wo_ref, o_ref,
                   *, heads, nope, rope, vdim, tq):
    i = pl.program_id(0)
    qn = qn_ref[...]                           # [tq, heads*nope] bf16
    qp = qp_ref[...]                           # [tq, heads*rope] bf16
    kn = kn_ref[...]                           # [tkv, heads*nope] bf16
    kp = kp_ref[...]                           # [tkv, rope] bf16 (single kv-head rope part)
    vv = v_ref[...]                            # [tkv, heads*vdim] bf16
    tkv = kn.shape[0]

    row = i * tq + lax.broadcasted_iota(jnp.int32, (tq, tkv), 0)
    col = lax.broadcasted_iota(jnp.int32, (tq, tkv), 1)
    causal = col <= row

    contract_last = (((1,), (1,)), ((), ()))   # contract last dims of both -> no k.T
    outs = []
    for h in range(heads):
        s = lax.dot_general(qn[:, h * nope:(h + 1) * nope],
                            kn[:, h * nope:(h + 1) * nope],
                            contract_last, preferred_element_type=jnp.float32)
        s = s + lax.dot_general(qp[:, h * rope:(h + 1) * rope], kp,
                                contract_last, preferred_element_type=jnp.float32)
        s = jnp.where(causal, s, -1e30)        # f32 softmax; scale already folded into q weights
        m = jnp.max(s, axis=-1, keepdims=True)
        pexp = jnp.exp(s - m)
        l = jnp.sum(pexp, axis=-1, keepdims=True)
        o_h = jnp.dot(pexp.astype(vv.dtype), vv[:, h * vdim:(h + 1) * vdim],
                      preferred_element_type=jnp.float32)
        outs.append(o_h * pl.reciprocal(l, approx=True))

    attn = jnp.concatenate(outs, axis=-1).astype(wo_ref.dtype)   # [tq, heads*vdim] lane-dense
    o_ref[...] = jnp.dot(attn, wo_ref[...], preferred_element_type=jnp.float32)


def fused_attn_oproj(q_nope, q_pe, k_nope, k_pe, v, w_o):
    t = q_nope.shape[0]
    tq = t                      # one query tile at demo size; grid scales over T for long seqs
    nq = t // tq
    tile = lambda i: (i, 0)
    full = lambda i: (0, 0)
    kernel = functools.partial(_attn_o_kernel, heads=NUM_HEADS, nope=QK_NOPE,
                               rope=QK_ROPE, vdim=V_HEAD, tq=tq)
    # TODO(synk): for production sequence lengths, tile K/V flash-style (online-softmax m/l/acc
    # scratch in VMEM) instead of keeping the full K/V block resident per query tile.
    return pl.pallas_call(
        kernel,
        out_shape=jax.ShapeDtypeStruct((t, HIDDEN), jnp.float32),
        grid=(nq,),
        in_specs=[
            pl.BlockSpec((tq, NUM_HEADS * QK_NOPE), tile),
            pl.BlockSpec((tq, NUM_HEADS * QK_ROPE), tile),
            pl.BlockSpec((t, NUM_HEADS * QK_NOPE), full),
            pl.BlockSpec((t, QK_ROPE), full),
            pl.BlockSpec((t, NUM_HEADS * V_HEAD), full),
            pl.BlockSpec((NUM_HEADS * V_HEAD, HIDDEN), full),
        ],
        out_specs=pl.BlockSpec((tq, HIDDEN), tile),
        compiler_params=_COMPILER_PARAMS,
    )(q_nope, q_pe, k_nope, k_pe, v, w_o)


# ------------------------- DeepSeek-YaRN rope tables (JAX glue) -------------------------
def _yarn_find_correction_dim(num_rot, dim, base, max_pos):
    return (dim * math.log(max_pos / (num_rot * 2 * math.pi))) / (2 * math.log(base))


def _yarn_find_correction_range(low_rot, high_rot, dim, base, max_pos):
    low = math.floor(_yarn_find_correction_dim(low_rot, dim, base, max_pos))
    high = math.ceil(_yarn_find_correction_dim(high_rot, dim, base, max_pos))
    return max(low, 0), min(high, dim - 1)


def _yarn_linear_ramp_mask(low, high, dim):
    if low == high:
        high += 0.001
    ramp = (jnp.arange(dim, dtype=jnp.float32) - low) / (high - low)
    return jnp.clip(ramp, 0.0, 1.0)


def _yarn_get_mscale(scale=1.0, mscale=1.0):
    if scale <= 1.0:
        return 1.0
    return 0.1 * mscale * math.log(scale) + 1.0


def deepseek_yarn_cos_sin(positions, rotary_dim, base, scaling):
    factor = scaling["factor"]
    pos_freqs = base ** (jnp.arange(0, rotary_dim, 2, dtype=jnp.float32) / rotary_dim)
    inv_freq_extra = 1.0 / pos_freqs
    inv_freq_inter = 1.0 / (factor * pos_freqs)
    low, high = _yarn_find_correction_range(
        scaling["beta_fast"], scaling["beta_slow"], rotary_dim, base,
        scaling["original_max_position_embeddings"])
    inv_freq_mask = 1.0 - _yarn_linear_ramp_mask(low, high, rotary_dim // 2)
    inv_freq = inv_freq_inter * (1.0 - inv_freq_mask) + inv_freq_extra * inv_freq_mask
    mscale = (_yarn_get_mscale(factor, scaling["mscale"])
              / _yarn_get_mscale(factor, scaling["mscale_all_dim"]))
    freqs = positions.astype(jnp.float32)[:, None] * inv_freq[None, :]
    return jnp.cos(freqs) * mscale, jnp.sin(freqs) * mscale


# ------------------------------ forward_normal ------------------------------
def deepseek_v3_mla_forward(positions, hidden_states, prep):
    cos, sin = deepseek_yarn_cos_sin(positions, QK_ROPE, ROPE_THETA, ROPE_SCALING)  # [T, R/2]
    x = hidden_states.astype(jnp.bfloat16)
    q_nope, q_pe, k_nope, k_pe, v = fused_qkv_proj(x, cos, sin, prep)
    # TODO(synk): forward_batch.token_to_kv_pool.set_kv_buffer (paged KV-cache writeback) has no
    # stateless Pallas equivalent; dense single-sequence causal prefill is used for attn_mha.
    return fused_attn_oproj(q_nope, q_pe, k_nope, k_pe, v, prep["w_o"])   # [T, HIDDEN] f32


# ------------------------------ params / preprocessing ------------------------------
def init_params(key):
    ks = jax.random.split(key, 5)

    def w(k, shape):
        return jax.random.normal(k, shape, jnp.float32) * 0.02

    return {
        # weights stored transposed ([in, out]) so kernels compute x @ w_t
        "w_qa_t": w(ks[0], (HIDDEN, Q_LORA)),
        "q_a_ln_w": jnp.ones((Q_LORA,), jnp.float32),
        "w_qb_t": w(ks[1], (Q_LORA, NUM_HEADS * QK_HEAD)),
        "w_kva_t": w(ks[2], (HIDDEN, KV_LORA + QK_ROPE)),
        "kv_a_ln_w": jnp.ones((KV_LORA,), jnp.float32),
        "w_kvb_t": w(ks[3], (KV_LORA, NUM_HEADS * (QK_NOPE + V_HEAD))),
        "w_o_t": w(ks[4], (NUM_HEADS * V_HEAD, HIDDEN)),
    }


def prepare_params(params):
    """One-time offline prep: split nope/rope/v weight columns, de-interleave the rope columns
    (GPT-J interleaved rotation -> split-half rotation, score-preserving since q_pe and k_pe get
    the identical permutation), fold the attention scale into the q_b weights, cast to bf16."""
    perm = jnp.concatenate([jnp.arange(0, QK_ROPE, 2), jnp.arange(1, QK_ROPE, 2)])

    w_qb = params["w_qb_t"].reshape(Q_LORA, NUM_HEADS, QK_HEAD)
    w_qb_nope = (w_qb[:, :, :QK_NOPE] * SCALING).reshape(Q_LORA, NUM_HEADS * QK_NOPE)
    w_qb_pe = (w_qb[:, :, QK_NOPE:][:, :, perm] * SCALING).reshape(Q_LORA, NUM_HEADS * QK_ROPE)

    w_kva = params["w_kva_t"][:, :KV_LORA]
    w_kpe = params["w_kva_t"][:, KV_LORA:][:, perm]

    w_kvb = params["w_kvb_t"].reshape(KV_LORA, NUM_HEADS, QK_NOPE + V_HEAD)
    w_kvb_nope = w_kvb[:, :, :QK_NOPE].reshape(KV_LORA, NUM_HEADS * QK_NOPE)
    w_kvb_v = w_kvb[:, :, QK_NOPE:].reshape(KV_LORA, NUM_HEADS * V_HEAD)

    bf = lambda a: a.astype(jnp.bfloat16)
    return {
        "w_qa": bf(params["w_qa_t"]),
        "q_ln": params["q_a_ln_w"].reshape(1, Q_LORA).astype(jnp.float32),
        "w_qb_nope": bf(w_qb_nope),
        "w_qb_pe": bf(w_qb_pe),
        "w_kva": bf(w_kva),
        "w_kpe": bf(w_kpe),
        "kv_ln": params["kv_a_ln_w"].reshape(1, KV_LORA).astype(jnp.float32),
        "w_kvb_nope": bf(w_kvb_nope),
        "w_kvb_v": bf(w_kvb_v),
        "w_o": bf(params["w_o_t"]),
    }


if __name__ == "__main__":
    key = jax.random.PRNGKey(0)
    pkey, hkey = jax.random.split(key)
    raw_params = init_params(pkey)
    prep = prepare_params(raw_params)

    hidden_states = jax.random.normal(hkey, (SEQ, HIDDEN), jnp.float32)
    positions = jnp.arange(SEQ, dtype=jnp.int32)

    fwd = jax.jit(deepseek_v3_mla_forward)
    out = fwd(positions, hidden_states, prep)
    jax.block_until_ready(out)

    assert out.shape == (SEQ, HIDDEN) and out.dtype == jnp.float32
    assert bool(jnp.all(jnp.isfinite(out)))
    print("KERNEL_OK")
</pallas_src>

<mosaic_0001>
module attributes {stable_mosaic.version = 11 : i64} {
  func.func @_proj_kernel(%arg0: i32, %arg1: memref<8x128xbf16, #tpu.memory_space<vmem>>, %arg2: memref<128x64xbf16, #tpu.memory_space<vmem>>, %arg3: memref<1x64xf32, #tpu.memory_space<vmem>>, %arg4: memref<64x128xbf16, #tpu.memory_space<vmem>>, %arg5: memref<64x64xbf16, #tpu.memory_space<vmem>>, %arg6: memref<128x128xbf16, #tpu.memory_space<vmem>>, %arg7: memref<128x32xbf16, #tpu.memory_space<vmem>>, %arg8: memref<1x128xf32, #tpu.memory_space<vmem>>, %arg9: memref<128x128xbf16, #tpu.memory_space<vmem>>, %arg10: memref<128x128xbf16, #tpu.memory_space<vmem>>, %arg11: memref<8x16xf32, #tpu.memory_space<vmem>>, %arg12: memref<8x16xf32, #tpu.memory_space<vmem>>, %arg13: memref<8x128xbf16, #tpu.memory_space<vmem>>, %arg14: memref<8x64xbf16, #tpu.memory_space<vmem>>, %arg15: memref<8x128xbf16, #tpu.memory_space<vmem>>, %arg16: memref<8x32xbf16, #tpu.memory_space<vmem>>, %arg17: memref<8x128xbf16, #tpu.memory_space<vmem>>) attributes {dimension_semantics = [#tpu.dimension_semantics<parallel>], iteration_bounds = array<i64: 1>, scalar_prefetch = 0 : i64, scratch_operands = 0 : i64, tpu.core_type = #tpu.core_type<tc>, window_params = [{transform_indices = @transform_0, window_bounds = array<i64: 8, 128>}, {pipeline_mode = #tpu.pipeline_mode<synchronous>, transform_indices = @transform_1, window_bounds = array<i64: 128, 64>}, {pipeline_mode = #tpu.pipeline_mode<synchronous>, transform_indices = @transform_2, window_bounds = array<i64: 1, 64>}, {pipeline_mode = #tpu.pipeline_mode<synchronous>, transform_indices = @transform_3, window_bounds = array<i64: 64, 128>}, {pipeline_mode = #tpu.pipeline_mode<synchronous>, transform_indices = @transform_4, window_bounds = array<i64: 64, 64>}, {pipeline_mode = #tpu.pipeline_mode<synchronous>, transform_indices = @transform_5, window_bounds = array<i64: 128, 128>}, {pipeline_mode = #tpu.pipeline_mode<synchronous>, transform_indices = @transform_6, window_bounds = array<i64: 128, 32>}, {pipeline_mode = #tpu.pipeline_mode<synchronous>, transform_indices = @transform_7, window_bounds = array<i64: 1, 128>}, {pipeline_mode = #tpu.pipeline_mode<synchronous>, transform_indices = @transform_8, window_bounds = array<i64: 128, 128>}, {pipeline_mode = #tpu.pipeline_mode<synchronous>, transform_indices = @transform_9, window_bounds = array<i64: 128, 128>}, {transform_indices = @transform_10, window_bounds = array<i64: 8, 16>}, {transform_indices = @transform_11, window_bounds = array<i64: 8, 16>}, {transform_indices = @transform_12, window_bounds = array<i64: 8, 128>}, {transform_indices = @transform_13, window_bounds = array<i64: 8, 64>}, {transform_indices = @transform_14, window_bounds = array<i64: 8, 128>}, {transform_indices = @transform_15, window_bounds = array<i64: 8, 32>}, {transform_indices = @transform_16, window_bounds = array<i64: 8, 128>}]} {
    %c0 = arith.constant 0 : index
    %c0_0 = arith.constant 0 : index
    %0 = vector.load %arg1[%c0, %c0_0] : memref<8x128xbf16, #tpu.memory_space<vmem>>, vector<8x128xbf16>
    %c0_1 = arith.constant 0 : index
    %c0_2 = arith.constant 0 : index
    %1 = vector.load %arg2[%c0_1, %c0_2] : memref<128x64xbf16, #tpu.memory_space<vmem>>, vector<128x64xbf16>
    %cst = arith.constant dense<0.000000e+00> : vector<8x64xf32>
    %2 = tpu.matmul %0, %1, %cst {dimension_numbers = #tpu.dot_dimension_numbers<[1], [0], [0], [1], [0, 0, 1, 1], [], []>} : vector<8x128xbf16>, vector<128x64xbf16>, vector<8x64xf32> -> vector<8x64xf32>
    %c0_3 = arith.constant 0 : index
    %c0_4 = arith.constant 0 : index
    %3 = vector.load %arg3[%c0_3, %c0_4] : memref<1x64xf32, #tpu.memory_space<vmem>>, vector<1x64xf32>
    %4 = arith.mulf %2, %2 : vector<8x64xf32>
    %cst_5 = arith.constant dense<0.000000e+00> : vector<8xf32>
    %5 = vector.multi_reduction <add>, %4, %cst_5 [1] : vector<8x64xf32> to vector<8xf32>
    %6 = vector.shape_cast %5 : vector<8xf32> to vector<8x1xf32>
    %cst_6 = arith.constant 6.400000e+01 : f32
    %7 = vector.broadcast %cst_6 : f32 to vector<8x1xf32>
    %8 = arith.divf %6, %7 : vector<8x1xf32>
    %cst_7 = arith.constant 9.99999997E-7 : f32
    %9 = vector.broadcast %cst_7 : f32 to vector<8x1xf32>
    %10 = arith.addf %8, %9 : vector<8x1xf32>
    %11 = math.rsqrt %10 : vector<8x1xf32>
    %12 = vector.broadcast %11 : vector<8x1xf32> to vector<8x64xf32>
    %13 = arith.mulf %2, %12 : vector<8x64xf32>
    %14 = vector.broadcast %3 : vector<1x64xf32> to vector<8x64xf32>
    %15 = arith.mulf %13, %14 : vector<8x64xf32>
    %16 = arith.truncf %15 : vector<8x64xf32> to vector<8x64xbf16>
    %c0_8 = arith.constant 0 : index
    %c0_9 = arith.constant 0 : index
    %17 = vector.load %arg4[%c0_8, %c0_9] : memref<64x128xbf16, #tpu.memory_space<vmem>>, vector<64x128xbf16>
    %cst_10 = arith.constant dense<0.000000e+00> : vector<8x128xf32>
    %18 = tpu.matmul %16, %17, %cst_10 {dimension_numbers = #tpu.dot_dimension_numbers<[1], [0], [0], [1], [0, 0, 1, 1], [], []>} : vector<8x64xbf16>, vector<64x128xbf16>, vector<8x128xf32> -> vector<8x128xf32>
    %19 = arith.truncf %18 : vector<8x128xf32> to vector<8x128xbf16>
    %c0_11 = arith.constant 0 : index
    %c0_12 = arith.constant 0 : index
    %20 = vector.load %arg13[%c0_11, %c0_12] : memref<8x128xbf16, #tpu.memory_space<vmem>>, vector<8x128xbf16>
    tpu.vector_store %arg13[%c0_11, %c0_12], %19 {strides = array<i32>} : memref<8x128xbf16, #tpu.memory_space<vmem>>, vector<8x128xbf16>,
    %c0_13 = arith.constant 0 : index
    %c0_14 = arith.constant 0 : index
    %21 = vector.load %arg5[%c0_13, %c0_14] : memref<64x64xbf16, #tpu.memory_space<vmem>>, vector<64x64xbf16>
    %cst_15 = arith.constant dense<0.000000e+00> : vector<8x64xf32>
    %22 = tpu.matmul %16, %21, %cst_15 {dimension_numbers = #tpu.dot_dimension_numbers<[1], [0], [0], [1], [0, 0, 1, 1], [], []>} : vector<8x64xbf16>, vector<64x64xbf16>, vector<8x64xf32> -> vector<8x64xf32>
    %c0_16 = arith.constant 0 : index
    %c0_17 = arith.constant 0 : index
    %23 = vector.load %arg6[%c0_16, %c0_17] : memref<128x128xbf16, #tpu.memory_space<vmem>>, vector<128x128xbf16>
    %cst_18 = arith.constant dense<0.000000e+00> : vector<8x128xf32>
    %24 = tpu.matmul %0, %23, %cst_18 {dimension_numbers = #tpu.dot_dimension_numbers<[1], [0], [0], [1], [0, 0, 1, 1], [], []>} : vector<8x128xbf16>, vector<128x128xbf16>, vector<8x128xf32> -> vector<8x128xf32>
    %c0_19 = arith.constant 0 : index
    %c0_20 = arith.constant 0 : index
    %25 = vector.load %arg7[%c0_19, %c0_20] : memref<128x32xbf16, #tpu.memory_space<vmem>>, vector<128x32xbf16>
    %cst_21 = arith.constant dense<0.000000e+00> : vector<8x32xf32>
    %26 = tpu.matmul %0, %25, %cst_21 {dimension_numbers = #tpu.dot_dimension_numbers<[1], [0], [0], [1], [0, 0, 1, 1], [], []>} : vector<8x128xbf16>, vector<128x32xbf16>, vector<8x32xf32> -> vector<8x32xf32>
    %c0_22 = arith.constant 0 : index
    %c0_23 = arith.constant 0 : index
    %27 = vector.load %arg8[%c0_22, %c0_23] : memref<1x128xf32, #tpu.memory_space<vmem>>, vector<1x128xf32>
    %28 = arith.mulf %24, %24 : vector<8x128xf32>
    %cst_24 = arith.constant dense<0.000000e+00> : vector<8xf32>
    %29 = vector.multi_reduction <add>, %28, %cst_24 [1] : vector<8x128xf32> to vector<8xf32>
    %30 = vector.shape_cast %29 : vector<8xf32> to vector<8x1xf32>
    %cst_25 = arith.constant 1.280000e+02 : f32
    %31 = vector.broadcast %cst_25 : f32 to vector<8x1xf32>
    %32 = arith.divf %30, %31 : vector<8x1xf32>
    %cst_26 = arith.constant 9.99999997E-7 : f32
    %33 = vector.broadcast %cst_26 : f32 to vector<8x1xf32>
    %34 = arith.addf %32, %33 : vector<8x1xf32>
    %35 = math.rsqrt %34 : vector<8x1xf32>
    %36 = vector.broadcast %35 : vector<8x1xf32> to vector<8x128xf32>
    %37 = arith.mulf %24, %36 : vector<8x128xf32>
    %38 = vector.broadcast %27 : vector<1x128xf32> to vector<8x128xf32>
    %39 = arith.mulf %37, %38 : vector<8x128xf32>
    %40 = arith.truncf %39 : vector<8x128xf32> to vector<8x128xbf16>
    %c0_27 = arith.constant 0 : index
    %c0_28 = arith.constant 0 : index
    %41 = vector.load %arg9[%c0_27, %c0_28] : memref<128x128xbf16, #tpu.memory_space<vmem>>, vector<128x128xbf16>
    %cst_29 = arith.constant dense<0.000000e+00> : vector<8x128xf32>
    %42 = tpu.matmul %40, %41, %cst_29 {dimension_numbers = #tpu.dot_dimension_numbers<[1], [0], [0], [1], [0, 0, 1, 1], [], []>} : vector<8x128xbf16>, vector<128x128xbf16>, vector<8x128xf32> -> vector<8x128xf32>
    %43 = arith.truncf %42 : vector<8x128xf32> to vector<8x128xbf16>
    %c0_30 = arith.constant 0 : index
    %c0_31 = arith.constant 0 : index
    %44 = vector.load %arg15[%c0_30, %c0_31] : memref<8x128xbf16, #tpu.memory_space<vmem>>, vector<8x128xbf16>
    tpu.vector_store %arg15[%c0_30, %c0_31], %43 {strides = array<i32>} : memref<8x128xbf16, #tpu.memory_space<vmem>>, vector<8x128xbf16>,
    %c0_32 = arith.constant 0 : index
    %c0_33 = arith.constant 0 : index
    %45 = vector.load %arg10[%c0_32, %c0_33] : memref<128x128xbf16, #tpu.memory_space<vmem>>, vector<128x128xbf16>
    %cst_34 = arith.constant dense<0.000000e+00> : vector<8x128xf32>
    %46 = tpu.matmul %40, %45, %cst_34 {dimension_numbers = #tpu.dot_dimension_numbers<[1], [0], [0], [1], [0, 0, 1, 1], [], []>} : vector<8x128xbf16>, vector<128x128xbf16>, vector<8x128xf32> -> vector<8x128xf32>
    %47 = arith.truncf %46 : vector<8x128xf32> to vector<8x128xbf16>
    %c0_35 = arith.constant 0 : index
    %c0_36 = arith.constant 0 : index
    %48 = vector.load %arg17[%c0_35, %c0_36] : memref<8x128xbf16, #tpu.memory_space<vmem>>, vector<8x128xbf16>
    tpu.vector_store %arg17[%c0_35, %c0_36], %47 {strides = array<i32>} : memref<8x128xbf16, #tpu.memory_space<vmem>>, vector<8x128xbf16>,
    %c0_37 = arith.constant 0 : index
    %c0_38 = arith.constant 0 : index
    %49 = vector.load %arg11[%c0_37, %c0_38] : memref<8x16xf32, #tpu.memory_space<vmem>>, vector<8x16xf32>
    %c0_39 = arith.constant 0 : index
    %c0_40 = arith.constant 0 : index
    %50 = vector.load %arg12[%c0_39, %c0_40] : memref<8x16xf32, #tpu.memory_space<vmem>>, vector<8x16xf32>
    %51 = vector.extract_strided_slice %22 {offsets = [0, 0], sizes = [8, 32], strides = [1, 1]} : vector<8x64xf32> to vector<8x32xf32>
    %52 = vector.extract_strided_slice %51 {offsets = [0, 0], sizes = [8, 16], strides = [1, 1]} : vector<8x32xf32> to vector<8x16xf32>
    %53 = vector.extract_strided_slice %51 {offsets = [0, 16], sizes = [8, 16], strides = [1, 1]} : vector<8x32xf32> to vector<8x16xf32>
    %54 = arith.mulf %52, %49 : vector<8x16xf32>
    %55 = arith.mulf %53, %50 : vector<8x16xf32>
    %56 = arith.subf %54, %55 : vector<8x16xf32>
    %57 = arith.mulf %53, %49 : vector<8x16xf32>
    %58 = arith.mulf %52, %50 : vector<8x16xf32>
    %59 = arith.addf %57, %58 : vector<8x16xf32>
    %60 = tpu.concatenate %56, %59 in 1 : vector<8x16xf32>, vector<8x16xf32> -> vector<8x32xf32>
    %61 = vector.extract_strided_slice %22 {offsets = [0, 32], sizes = [8, 32], strides = [1, 1]} : vector<8x64xf32> to vector<8x32xf32>
    %62 = vector.extract_strided_slice %61 {offsets = [0, 0], sizes = [8, 16], strides = [1, 1]} : vector<8x32xf32> to vector<8x16xf32>
    %63 = vector.extract_strided_slice %61 {offsets = [0, 16], sizes = [8, 16], strides = [1, 1]} : vector<8x32xf32> to vector<8x16xf32>
    %64 = arith.mulf %62, %49 : vector<8x16xf32>
    %65 = arith.mulf %63, %50 : vector<8x16xf32>
    %66 = arith.subf %64, %65 : vector<8x16xf32>
    %67 = arith.mulf %63, %49 : vector<8x16xf32>
    %68 = arith.mulf %62, %50 : vector<8x16xf32>
    %69 = arith.addf %67, %68 : vector<8x16xf32>
    %70 = tpu.concatenate %66, %69 in 1 : vector<8x16xf32>, vector<8x16xf32> -> vector<8x32xf32>
    %71 = tpu.concatenate %60, %70 in 1 : vector<8x32xf32>, vector<8x32xf32> -> vector<8x64xf32>
    %72 = arith.truncf %71 : vector<8x64xf32> to vector<8x64xbf16>
    %c0_41 = arith.constant 0 : index
    %c0_42 = arith.constant 0 : index
    %73 = vector.load %arg14[%c0_41, %c0_42] : memref<8x64xbf16, #tpu.memory_space<vmem>>, vector<8x64xbf16>
    tpu.vector_store %arg14[%c0_41, %c0_42], %72 {strides = array<i32>} : memref<8x64xbf16, #tpu.memory_space<vmem>>, vector<8x64xbf16>,
    %74 = vector.extract_strided_slice %26 {offsets = [0, 0], sizes = [8, 16], strides = [1, 1]} : vector<8x32xf32> to vector<8x16xf32>
    %75 = vector.extract_strided_slice %26 {offsets = [0, 16], sizes = [8, 16], strides = [1, 1]} : vector<8x32xf32> to vector<8x16xf32>
    %76 = arith.mulf %74, %49 : vector<8x16xf32>
    %77 = arith.mulf %75, %50 : vector<8x16xf32>
    %78 = arith.subf %76, %77 : vector<8x16xf32>
    %79 = arith.mulf %75, %49 : vector<8x16xf32>
    %80 = arith.mulf %74, %50 : vector<8x16xf32>
    %81 = arith.addf %79, %80 : vector<8x16xf32>
    %82 = tpu.concatenate %78, %81 in 1 : vector<8x16xf32>, vector<8x16xf32> -> vector<8x32xf32>
    %83 = arith.truncf %82 : vector<8x32xf32> to vector<8x32xbf16>
    %c0_43 = arith.constant 0 : index
    %c0_44 = arith.constant 0 : index
    %84 = vector.load %arg16[%c0_43, %c0_44] : memref<8x32xbf16, #tpu.memory_space<vmem>>, vector<8x32xbf16>
    tpu.vector_store %arg16[%c0_43, %c0_44], %83 {strides = array<i32>} : memref<8x32xbf16, #tpu.memory_space<vmem>>, vector<8x32xbf16>,
    return
  }
  func.func @transform_0(%arg0: i32) -> (i32, i32) {
    %c0_i32 = arith.constant 0 : i32
    %c0_i32_0 = arith.constant 0 : i32
    return %arg0, %c0_i32 : i32, i32
  }
  func.func @transform_1(%arg0: i32) -> (i32, i32) {
    %c0_i32 = arith.constant 0 : i32
    %c0_i32_0 = arith.constant 0 : i32
    %c0_i32_1 = arith.constant 0 : i32
    return %c0_i32, %c0_i32_0 : i32, i32
  }
  func.func @transform_2(%arg0: i32) -> (i32, i32) {
    %c0_i32 = arith.constant 0 : i32
    %c0_i32_0 = arith.constant 0 : i32
    %c0_i32_1 = arith.constant 0 : i32
    return %c0_i32, %c0_i32_0 : i32, i32
  }
  func.func @transform_3(%arg0: i32) -> (i32, i32) {
    %c0_i32 = arith.constant 0 : i32
    %c0_i32_0 = arith.constant 0 : i32
    %c0_i32_1 = arith.constant 0 : i32
    return %c0_i32, %c0_i32_0 : i32, i32
  }
  func.func @transform_4(%arg0: i32) -> (i32, i32) {
    %c0_i32 = arith.constant 0 : i32
    %c0_i32_0 = arith.constant 0 : i32
    %c0_i32_1 = arith.constant 0 : i32
    return %c0_i32, %c0_i32_0 : i32, i32
  }
  func.func @transform_5(%arg0: i32) -> (i32, i32) {
    %c0_i32 = arith.constant 0 : i32
    %c0_i32_0 = arith.constant 0 : i32
    %c0_i32_1 = arith.constant 0 : i32
    return %c0_i32, %c0_i32_0 : i32, i32
  }
  func.func @transform_6(%arg0: i32) -> (i32, i32) {
    %c0_i32 = arith.constant 0 : i32
    %c0_i32_0 = arith.constant 0 : i32
    %c0_i32_1 = arith.constant 0 : i32
    return %c0_i32, %c0_i32_0 : i32, i32
  }
  func.func @transform_7(%arg0: i32) -> (i32, i32) {
    %c0_i32 = arith.constant 0 : i32
    %c0_i32_0 = arith.constant 0 : i32
    %c0_i32_1 = arith.constant 0 : i32
    return %c0_i32, %c0_i32_0 : i32, i32
  }
  func.func @transform_8(%arg0: i32) -> (i32, i32) {
    %c0_i32 = arith.constant 0 : i32
    %c0_i32_0 = arith.constant 0 : i32
    %c0_i32_1 = arith.constant 0 : i32
    return %c0_i32, %c0_i32_0 : i32, i32
  }
  func.func @transform_9(%arg0: i32) -> (i32, i32) {
    %c0_i32 = arith.constant 0 : i32
    %c0_i32_0 = arith.constant 0 : i32
    %c0_i32_1 = arith.constant 0 : i32
    return %c0_i32, %c0_i32_0 : i32, i32
  }
  func.func @transform_10(%arg0: i32) -> (i32, i32) {
    %c0_i32 = arith.constant 0 : i32
    %c0_i32_0 = arith.constant 0 : i32
    return %arg0, %c0_i32 : i32, i32
  }
  func.func @transform_11(%arg0: i32) -> (i32, i32) {
    %c0_i32 = arith.constant 0 : i32
    %c0_i32_0 = arith.constant 0 : i32
    return %arg0, %c0_i32 : i32, i32
  }
  func.func @transform_12(%arg0: i32) -> (i32, i32) {
    %c0_i32 = arith.constant 0 : i32
    %c0_i32_0 = arith.constant 0 : i32
    return %arg0, %c0_i32 : i32, i32
  }
  func.func @transform_13(%arg0: i32) -> (i32, i32) {
    %c0_i32 = arith.constant 0 : i32
    %c0_i32_0 = arith.constant 0 : i32
    return %arg0, %c0_i32 : i32, i32
  }
  func.func @transform_14(%arg0: i32) -> (i32, i32) {
    %c0_i32 = arith.constant 0 : i32
    %c0_i32_0 = arith.constant 0 : i32
    return %arg0, %c0_i32 : i32, i32
  }
  func.func @transform_15(%arg0: i32) -> (i32, i32) {
    %c0_i32 = arith.constant 0 : i32
    %c0_i32_0 = arith.constant 0 : i32
    return %arg0, %c0_i32 : i32, i32
  }
  func.func @transform_16(%arg0: i32) -> (i32, i32) {
    %c0_i32 = arith.constant 0 : i32
    %c0_i32_0 = arith.constant 0 : i32
    return %arg0, %c0_i32 : i32, i32
  }
}

module attributes {stable_mosaic.version = 11 : i64} {
  func.func @_attn_o_kernel(%arg0: i32, %arg1: memref<8x128xbf16, #tpu.memory_space<vmem>>, %arg2: memref<8x64xbf16, #tpu.memory_space<vmem>>, %arg3: memref<8x128xbf16, #tpu.memory_space<vmem>>, %arg4: memref<8x32xbf16, #tpu.memory_space<vmem>>, %arg5: memref<8x128xbf16, #tpu.memory_space<vmem>>, %arg6: memref<128x128xbf16, #tpu.memory_space<vmem>>, %arg7: memref<8x128xf32, #tpu.memory_space<vmem>>) attributes {dimension_semantics = [#tpu.dimension_semantics<parallel>], iteration_bounds = array<i64: 1>, scalar_prefetch = 0 : i64, scratch_operands = 0 : i64, tpu.core_type = #tpu.core_type<tc>, window_params = [{transform_indices = @transform_0, window_bounds = array<i64: 8, 128>}, {transform_indices = @transform_1, window_bounds = array<i64: 8, 64>}, {pipeline_mode = #tpu.pipeline_mode<synchronous>, transform_indices = @transform_2, window_bounds = array<i64: 8, 128>}, {pipeline_mode = #tpu.pipeline_mode<synchronous>, transform_indices = @transform_3, window_bounds = array<i64: 8, 32>}, {pipeline_mode = #tpu.pipeline_mode<synchronous>, transform_indices = @transform_4, window_bounds = array<i64: 8, 128>}, {pipeline_mode = #tpu.pipeline_mode<synchronous>, transform_indices = @transform_5, window_bounds = array<i64: 128, 128>}, {transform_indices = @transform_6, window_bounds = array<i64: 8, 128>}]} {
    %c0 = arith.constant 0 : index
    %c0_0 = arith.constant 0 : index
    %0 = vector.load %arg1[%c0, %c0_0] : memref<8x128xbf16, #tpu.memory_space<vmem>>, vector<8x128xbf16>
    %c0_1 = arith.constant 0 : index
    %c0_2 = arith.constant 0 : index
    %1 = vector.load %arg2[%c0_1, %c0_2] : memref<8x64xbf16, #tpu.memory_space<vmem>>, vector<8x64xbf16>
    %c0_3 = arith.constant 0 : index
    %c0_4 = arith.constant 0 : index
    %2 = vector.load %arg3[%c0_3, %c0_4] : memref<8x128xbf16, #tpu.memory_space<vmem>>, vector<8x128xbf16>
    %c0_5 = arith.constant 0 : index
    %c0_6 = arith.constant 0 : index
    %3 = vector.load %arg4[%c0_5, %c0_6] : memref<8x32xbf16, #tpu.memory_space<vmem>>, vector<8x32xbf16>
    %c0_7 = arith.constant 0 : index
    %c0_8 = arith.constant 0 : index
    %4 = vector.load %arg5[%c0_7, %c0_8] : memref<8x128xbf16, #tpu.memory_space<vmem>>, vector<8x128xbf16>
    %c8_i32 = arith.constant 8 : i32
    %5 = arith.muli %arg0, %c8_i32 : i32
    %6 = tpu.iota {dimensions = array<i32: 0>} : vector<8x8xi32>
    %7 = vector.broadcast %5 : i32 to vector<8x8xi32>
    %8 = arith.addi %7, %6 : vector<8x8xi32>
    %9 = tpu.iota {dimensions = array<i32: 1>} : vector<8x8xi32>
    %10 = arith.cmpi sle, %9, %8 : vector<8x8xi32>
    %11 = vector.extract_strided_slice %0 {offsets = [0, 0], sizes = [8, 64], strides = [1, 1]} : vector<8x128xbf16> to vector<8x64xbf16>
    %12 = vector.extract_strided_slice %2 {offsets = [0, 0], sizes = [8, 64], strides = [1, 1]} : vector<8x128xbf16> to vector<8x64xbf16>
    %cst = arith.constant dense<0.000000e+00> : vector<8x8xf32>
    %13 = tpu.matmul %11, %12, %cst {dimension_numbers = #tpu.dot_dimension_numbers<[1], [1], [0], [0], [0, 0, 1, 0], [], []>} : vector<8x64xbf16>, vector<8x64xbf16>, vector<8x8xf32> -> vector<8x8xf32>
    %14 = vector.extract_strided_slice %1 {offsets = [0, 0], sizes = [8, 32], strides = [1, 1]} : vector<8x64xbf16> to vector<8x32xbf16>
    %cst_9 = arith.constant dense<0.000000e+00> : vector<8x8xf32>
    %15 = tpu.matmul %14, %3, %cst_9 {dimension_numbers = #tpu.dot_dimension_numbers<[1], [1], [0], [0], [0, 0, 1, 0], [], []>} : vector<8x32xbf16>, vector<8x32xbf16>, vector<8x8xf32> -> vector<8x8xf32>
    %16 = arith.addf %13, %15 : vector<8x8xf32>
    %cst_10 = arith.constant -1.000000e+30 : f32
    %17 = vector.broadcast %cst_10 : f32 to vector<8x8xf32>
    %18 = arith.select %10, %16, %17 : vector<8x8xi1>, vector<8x8xf32>
    %cst_11 = arith.constant dense<0xFF800000> : vector<8xf32>
    %19 = vector.multi_reduction <maximumf>, %18, %cst_11 [1] : vector<8x8xf32> to vector<8xf32>
    %20 = vector.shape_cast %19 : vector<8xf32> to vector<8x1xf32>
    %21 = vector.broadcast %20 : vector<8x1xf32> to vector<8x8xf32>
    %22 = arith.subf %18, %21 : vector<8x8xf32>
    %23 = math.exp %22 : vector<8x8xf32>
    %cst_12 = arith.constant dense<0.000000e+00> : vector<8xf32>
    %24 = vector.multi_reduction <add>, %23, %cst_12 [1] : vector<8x8xf32> to vector<8xf32>
    %25 = vector.shape_cast %24 : vector<8xf32> to vector<8x1xf32>
    %26 = arith.truncf %23 : vector<8x8xf32> to vector<8x8xbf16>
    %27 = vector.extract_strided_slice %4 {offsets = [0, 0], sizes = [8, 64], strides = [1, 1]} : vector<8x128xbf16> to vector<8x64xbf16>
    %cst_13 = arith.constant dense<0.000000e+00> : vector<8x64xf32>
    %28 = tpu.matmul %26, %27, %cst_13 {dimension_numbers = #tpu.dot_dimension_numbers<[1], [0], [0], [1], [0, 0, 1, 1], [], []>} : vector<8x8xbf16>, vector<8x64xbf16>, vector<8x64xf32> -> vector<8x64xf32>
    %29 = tpu.reciprocal %25 {approx = true} : vector<8x1xf32> -> vector<8x1xf32>
    %30 = vector.broadcast %29 : vector<8x1xf32> to vector<8x64xf32>
    %31 = arith.mulf %28, %30 : vector<8x64xf32>
    %32 = vector.extract_strided_slice %0 {offsets = [0, 64], sizes = [8, 64], strides = [1, 1]} : vector<8x128xbf16> to vector<8x64xbf16>
    %33 = vector.extract_strided_slice %2 {offsets = [0, 64], sizes = [8, 64], strides = [1, 1]} : vector<8x128xbf16> to vector<8x64xbf16>
    %cst_14 = arith.constant dense<0.000000e+00> : vector<8x8xf32>
    %34 = tpu.matmul %32, %33, %cst_14 {dimension_numbers = #tpu.dot_dimension_numbers<[1], [1], [0], [0], [0, 0, 1, 0], [], []>} : vector<8x64xbf16>, vector<8x64xbf16>, vector<8x8xf32> -> vector<8x8xf32>
    %35 = vector.extract_strided_slice %1 {offsets = [0, 32], sizes = [8, 32], strides = [1, 1]} : vector<8x64xbf16> to vector<8x32xbf16>
    %cst_15 = arith.constant dense<0.000000e+00> : vector<8x8xf32>
    %36 = tpu.matmul %35, %3, %cst_15 {dimension_numbers = #tpu.dot_dimension_numbers<[1], [1], [0], [0], [0, 0, 1, 0], [], []>} : vector<8x32xbf16>, vector<8x32xbf16>, vector<8x8xf32> -> vector<8x8xf32>
    %37 = arith.addf %34, %36 : vector<8x8xf32>
    %cst_16 = arith.constant -1.000000e+30 : f32
    %38 = vector.broadcast %cst_16 : f32 to vector<8x8xf32>
    %39 = arith.select %10, %37, %38 : vector<8x8xi1>, vector<8x8xf32>
    %cst_17 = arith.constant dense<0xFF800000> : vector<8xf32>
    %40 = vector.multi_reduction <maximumf>, %39, %cst_17 [1] : vector<8x8xf32> to vector<8xf32>
    %41 = vector.shape_cast %40 : vector<8xf32> to vector<8x1xf32>
    %42 = vector.broadcast %41 : vector<8x1xf32> to vector<8x8xf32>
    %43 = arith.subf %39, %42 : vector<8x8xf32>
    %44 = math.exp %43 : vector<8x8xf32>
    %cst_18 = arith.constant dense<0.000000e+00> : vector<8xf32>
    %45 = vector.multi_reduction <add>, %44, %cst_18 [1] : vector<8x8xf32> to vector<8xf32>
    %46 = vector.shape_cast %45 : vector<8xf32> to vector<8x1xf32>
    %47 = arith.truncf %44 : vector<8x8xf32> to vector<8x8xbf16>
    %48 = vector.extract_strided_slice %4 {offsets = [0, 64], sizes = [8, 64], strides = [1, 1]} : vector<8x128xbf16> to vector<8x64xbf16>
    %cst_19 = arith.constant dense<0.000000e+00> : vector<8x64xf32>
    %49 = tpu.matmul %47, %48, %cst_19 {dimension_numbers = #tpu.dot_dimension_numbers<[1], [0], [0], [1], [0, 0, 1, 1], [], []>} : vector<8x8xbf16>, vector<8x64xbf16>, vector<8x64xf32> -> vector<8x64xf32>
    %50 = tpu.reciprocal %46 {approx = true} : vector<8x1xf32> -> vector<8x1xf32>
    %51 = vector.broadcast %50 : vector<8x1xf32> to vector<8x64xf32>
    %52 = arith.mulf %49, %51 : vector<8x64xf32>
    %53 = tpu.concatenate %31, %52 in 1 : vector<8x64xf32>, vector<8x64xf32> -> vector<8x128xf32>
    %54 = arith.truncf %53 : vector<8x128xf32> to vector<8x128xbf16>
    %c0_20 = arith.constant 0 : index
    %c0_21 = arith.constant 0 : index
    %55 = vector.load %arg6[%c0_20, %c0_21] : memref<128x128xbf16, #tpu.memory_space<vmem>>, vector<128x128xbf16>
    %cst_22 = arith.constant dense<0.000000e+00> : vector<8x128xf32>
    %56 = tpu.matmul %54, %55, %cst_22 {dimension_numbers = #tpu.dot_dimension_numbers<[1], [0], [0], [1], [0, 0, 1, 1], [], []>} : vector<8x128xbf16>, vector<128x128xbf16>, vector<8x128xf32> -> vector<8x128xf32>
    %c0_23 = arith.constant 0 : index
    %c0_24 = arith.constant 0 : index
    %57 = vector.load %arg7[%c0_23, %c0_24] : memref<8x128xf32, #tpu.memory_space<vmem>>, vector<8x128xf32>
    tpu.vector_store %arg7[%c0_23, %c0_24], %56 {strides = array<i32>} : memref<8x128xf32, #tpu.memory_space<vmem>>, vector<8x128xf32>,
    return
  }
  func.func @transform_0(%arg0: i32) -> (i32, i32) {
    %c0_i32 = arith.constant 0 : i32
    %c0_i32_0 = arith.constant 0 : i32
    return %arg0, %c0_i32 : i32, i32
  }
  func.func @transform_1(%arg0: i32) -> (i32, i32) {
    %c0_i32 = arith.constant 0 : i32
    %c0_i32_0 = arith.constant 0 : i32
    return %arg0, %c0_i32 : i32, i32
  }
  func.func @transform_2(%arg0: i32) -> (i32, i32) {
    %c0_i32 = arith.constant 0 : i32
    %c0_i32_0 = arith.constant 0 : i32
    %c0_i32_1 = arith.constant 0 : i32
    return %c0_i32, %c0_i32_0 : i32, i32
  }
  func.func @transform_3(%arg0: i32) -> (i32, i32) {
    %c0_i32 = arith.constant 0 : i32
    %c0_i32_0 = arith.constant 0 : i32
    %c0_i32_1 = arith.constant 0 : i32
    return %c0_i32, %c0_i32_0 : i32, i32
  }
  func.func @transform_4(%arg0: i32) -> (i32, i32) {
    %c0_i32 = arith.constant 0 : i32
    %c0_i32_0 = arith.constant 0 : i32
    %c0_i32_1 = arith.constant 0 : i32
    return %c0_i32, %c0_i32_0 : i32, i32
  }
  func.func @transform_5(%arg0: i32) -> (i32, i32) {
    %c0_i32 = arith.constant 0 : i32
    %c0_i32_0 = arith.constant 0 : i32
    %c0_i32_1 = arith.constant 0 : i32
    return %c0_i32, %c0_i32_0 : i32, i32
  }
  func.func @transform_6(%arg0: i32) -> (i32, i32) {
    %c0_i32 = arith.constant 0 : i32
    %c0_i32_0 = arith.constant 0 : i32
    return %arg0, %c0_i32 : i32, i32
  }
}

</mosaic_0001>

<llo_original>
// kernel: deepseek_v3_mla_forward.3
$region0: #{deepseek_v3_mla_forward.3}
  #allocation0 [shape = 'u32[]', space=smem, size = 0x4, offset = 0x4, fixed_abs, tag = 'smem constant byte address 0x4 - core index']
  #allocation1 [shape = 'u32[144,128]{1,0:T(1,128)}', space=vmem, size = 0x12000, scoped, tag = 'internal scratch']
  %s0 = inlined_call_operand.vmem [shape: bf16[8,128], index: 0, kind: input, shape index: {}]
  %s1 = inlined_call_operand.vmem [shape: bf16[8,64], index: 1, kind: input, shape index: {}]
  %s2 = inlined_call_operand.vmem [shape: bf16[8,128], index: 2, kind: input, shape index: {}]
  %s3 = inlined_call_operand.vmem [shape: bf16[8,32], index: 3, kind: input, shape index: {}]
  %s4 = inlined_call_operand.vmem [shape: bf16[8,128], index: 4, kind: input, shape index: {}]
  %s5 = inlined_call_operand.vmem [shape: bf16[128,128], index: 5, kind: input, shape index: {}]
  %s6 = inlined_call_operand.hbm [shape: f32[8,128], index: 6, kind: output, shape index: {}]
  %s7 = sld [smem:[#allocation0]]
  $region34: #{deepseek_v3_mla_forward.3} parent=0
    _
  %s9 = ssub.s32 1, %s7
  %s10 = scalar_select 0, %s9, %s7
  $region1: #{deepseek_v3_mla_forward.3} parent=0
    #allocation2 [shape = 'u8[4096]{0}', space=vmem, size = 0x1000, scoped, tag = 'output window, operand 0, single buffered']
    #allocation3 [shape = 's32[1]{0}', space=sflag, size = 0x4, scoped, tag = 'scoped memory for deepseek_v3_mla_forward.3']
    %11 = vsyncpa [#allocation3], 0
    // Predicated region
    $region2: #{deepseek_v3_mla_forward.3} parent=1 // pred_check
      _
    $region3: #{deepseek_v3_mla_forward.3} parent=1 // pred_check_branch
      %13 = sbr.rel (0) target = $region5
    $region4: #{deepseek_v3_mla_forward.3} parent=1 // pred_region
      _
    $region5: #{deepseek_v3_mla_forward.3} parent=1 // pred_fallthru
      _
    // Predicated region
    $region6: #{deepseek_v3_mla_forward.3} parent=1 // pred_check
      _
    $region7: #{deepseek_v3_mla_forward.3} parent=1 // pred_check_branch
      %15 = sbr.rel (0) target = $region9
    $region8: #{deepseek_v3_mla_forward.3} parent=1 // pred_region
      _
    $region9: #{deepseek_v3_mla_forward.3} parent=1 // pred_fallthru
      _
    // Predicated region
    $region10: #{deepseek_v3_mla_forward.3} parent=1 // pred_check
      _
    $region11: #{deepseek_v3_mla_forward.3} parent=1 // pred_check_branch
      %17 = sbr.rel (0) target = $region13
    $region12: #{deepseek_v3_mla_forward.3} parent=1 // pred_region
      _
    $region13: #{deepseek_v3_mla_forward.3} parent=1 // pred_fallthru
      _
    // Predicated region
    $region14: #{deepseek_v3_mla_forward.3} parent=1 // pred_check
      _
    $region15: #{deepseek_v3_mla_forward.3} parent=1 // pred_check_branch
      %19 = sbr.rel (0) target = $region17
    $region16: #{deepseek_v3_mla_forward.3} parent=1 // pred_region
      _
    $region17: #{deepseek_v3_mla_forward.3} parent=1 // pred_fallthru
      _
    // Predicated region
    $region18: #{deepseek_v3_mla_forward.3} parent=1 // pred_check
      _
    $region19: #{deepseek_v3_mla_forward.3} parent=1 // pred_check_branch
      %21 = sbr.rel (0) target = $region21
    $region20: #{deepseek_v3_mla_forward.3} parent=1 // pred_region
      _
    $region21: #{deepseek_v3_mla_forward.3} parent=1 // pred_fallthru
      _
    // Predicated region
    $region22: #{deepseek_v3_mla_forward.3} parent=1 // pred_check
      _
    $region23: #{deepseek_v3_mla_forward.3} parent=1 // pred_check_branch
      %23 = sbr.rel (0) target = $region25
    $region24: #{deepseek_v3_mla_forward.3} parent=1 // pred_region
      _
    $region25: #{deepseek_v3_mla_forward.3} parent=1 // pred_fallthru
      _
    %v25 = vld [vmem:[%s0] sm:$0xf]
    %v26 = vld [vmem:[%s1] sm:$0xf]
    %v27 = vld [vmem:[%s2] sm:$0xf]
    %v28 = vld [vmem:[%s3] sm:$0xf]
    %v29 = vld [vmem:[%s4] sm:$0xf]
    %s30 = smul.u32 0, 8
    %v31 = vlaneseq
    %v32 = vshrl.u32 %v31, 7
    %v33 = vstv %s30
    %v34 = vadd.s32 %v33, %v32
    %v35 = vlaneseq
    %v36 = vand.u32 %v35, 127
    %vm37 = vcmp.le.s32.totalorder %v36, %v34
    %vm38 = vcmask 261120
    %v40 = vsel %vm38, %v26, 0
    %v43 = vsel %vm38, %v28, 0
    %45 = vmatprep.subr.bf16.mxu0 0
    %46 = vmatpush1.bf16.xpose.msra.mxu0 %v43
    %47 = vmatprep.subr.bf16.mxu0 0
    %48 = vmatpush1.bf16.xpose.msra.mxu0 0
    %49 = vmatprep.subr.bf16.mxu0 0
    %50 = vmatpush1.bf16.xpose.msra.mxu0 0
    %51 = vmatprep.subr.bf16.mxu0 0
    %52 = vmatpush1.bf16.xpose.msra.mxu0 0
    %53 = vmatprep.subr.bf16.mxu0 0
    %54 = vmatpush1.bf16.xpose.msra.mxu0 0
    %55 = vmatprep.subr.bf16.mxu0 0
    %56 = vmatpush1.bf16.xpose.msra.mxu0 0
    %57 = vmatprep.subr.bf16.mxu0 0
    %58 = vmatpush1.bf16.xpose.msra.mxu0 0
    %59 = vmatprep.subr.bf16.mxu0 0
    %60 = vmatpush1.bf16.xpose.msra.mxu0 0
    %61 = vmatprep.subr.bf16.mxu0 0
    %62 = vmatpush1.bf16.xpose.msra.mxu0 0
    %63 = vmatprep.subr.bf16.mxu0 0
    %64 = vmatpush1.bf16.xpose.msra.mxu0 0
    %65 = vmatprep.subr.bf16.mxu0 0
    %66 = vmatpush1.bf16.xpose.msra.mxu0 0
    %67 = vmatprep.subr.bf16.mxu0 0
    %68 = vmatpush1.bf16.xpose.msra.mxu0 0
    %69 = vmatprep.subr.bf16.mxu0 0
    %70 = vmatpush1.bf16.xpose.msra.mxu0 0
    %71 = vmatprep.subr.bf16.mxu0 0
    %72 = vmatpush1.bf16.xpose.msra.mxu0 0
    %73 = vmatprep.subr.bf16.mxu0 0
    %74 = vmatpush1.bf16.xpose.msra.mxu0 0
    %75 = vmatprep.subr.bf16.mxu0 0
    %76 = vmatpush1.bf16.xpose.msra.mxu0 0
    %77 = vmatprep.mubr.bf16.mxu0 0
    %78 = vmatmul.mubr.bf16.gmra.mrb[0].mxu0 %v40
    %v79 = vpop.f32.mrb[0].mxu0
    %v80 = vadd.f32 0.0, %v79
    %v81 = vpop.f32.mrb[0].mxu0
    %v82 = vpop.f32.mrb[0].mxu0
    %v83 = vpop.f32.mrb[0].mxu0
    %84 = vdwg.mxu0
    %vm85 = vcmask 523264
    %v87 = vsel %vm85, %v25, 0
    %v90 = vsel %vm85, %v27, 0
    %92 = vmatprep.subr.bf16.mxu0 0
    %93 = vmatpush1.bf16.xpose.msra.mxu0 %v90
    %94 = vmatprep.subr.bf16.mxu0 0
    %95 = vmatpush1.bf16.xpose.msra.mxu0 0
    %96 = vmatprep.subr.bf16.mxu0 0
    %97 = vmatpush1.bf16.xpose.msra.mxu0 0
    %98 = vmatprep.subr.bf16.mxu0 0
    %99 = vmatpush1.bf16.xpose.msra.mxu0 0
    %100 = vmatprep.subr.bf16.mxu0 0
    %101 = vmatpush1.bf16.xpose.msra.mxu0 0
    %102 = vmatprep.subr.bf16.mxu0 0
    %103 = vmatpush1.bf16.xpose.msra.mxu0 0
    %104 = vmatprep.subr.bf16.mxu0 0
    %105 = vmatpush1.bf16.xpose.msra.mxu0 0
    %106 = vmatprep.subr.bf16.mxu0 0
    %107 = vmatpush1.bf16.xpose.msra.mxu0 0
    %108 = vmatprep.subr.bf16.mxu0 0
    %109 = vmatpush1.bf16.xpose.msra.mxu0 0
    %110 = vmatprep.subr.bf16.mxu0 0
    %111 = vmatpush1.bf16.xpose.msra.mxu0 0
    %112 = vmatprep.subr.bf16.mxu0 0
    %113 = vmatpush1.bf16.xpose.msra.mxu0 0
    %114 = vmatprep.subr.bf16.mxu0 0
    %115 = vmatpush1.bf16.xpose.msra.mxu0 0
    %116 = vmatprep.subr.bf16.mxu0 0
    %117 = vmatpush1.bf16.xpose.msra.mxu0 0
    %118 = vmatprep.subr.bf16.mxu0 0
    %119 = vmatpush1.bf16.xpose.msra.mxu0 0
    %120 = vmatprep.subr.bf16.mxu0 0
    %121 = vmatpush1.bf16.xpose.msra.mxu0 0
    %122 = vmatprep.subr.bf16.mxu0 0
    %123 = vmatpush1.bf16.xpose.msra.mxu0 0
    %124 = vmatprep.mubr.bf16.mxu0 0
    %125 = vmatmul.mubr.bf16.gmra.mrb[0].mxu0 %v87
    %v126 = vpop.f32.mrb[0].mxu0
    %v127 = vadd.f32 %v80, %v126
    %v128 = vpop.f32.mrb[0].mxu0
    %v129 = vpop.f32.mrb[0].mxu0
    %v130 = vpop.f32.mrb[0].mxu0
    %131 = vdwg.mxu0
    %v132 = vsel %vm37, %v127, -1e+30
    %vm133 = vcmask 64512
    %v134 = vsel %vm133, %v132, -inf
    %135 = vmax.xlane.f32.xlu0 %v134
    %v136 = vpop.xlane.xlu0 %135
    %v137 = vsub.f32 %v132, %v136
    %v138 = vmul.f32 %v137, 1.442695
    %v139 = vpow.pop %v138
    %v140 = vsel %vm133, %v139, 0.0
    %141 = vadd.xlane.f32.xlu0 %v140
    %v142 = vpop.xlane.xlu0 %141
    %v143 = vpack.c.bf16 %v139, %v139
    %v145 = vsel %vm133, %v143, 0
    %vm147 = vcmask 1043456
    %v149 = vsel %vm147, %v29, 0
    %151 = vmatprep.subr.bf16.mxu0 0
    %152 = vmatpush1.bf16.msra.mxu0 %v149
    %153 = vmatprep.subr.bf16.mxu0 0
    %154 = vmatpush1.bf16.msra.mxu0 0
    %155 = vmatprep.subr.bf16.mxu0 0
    %156 = vmatpush1.bf16.msra.mxu0 0
    %157 = vmatprep.subr.bf16.mxu0 0
    %158 = vmatpush1.bf16.msra.mxu0 0
    %159 = vmatprep.subr.bf16.mxu0 0
    %160 = vmatpush1.bf16.msra.mxu0 0
    %161 = vmatprep.subr.bf16.mxu0 0
    %162 = vmatpush1.bf16.msra.mxu0 0
    %163 = vmatprep.subr.bf16.mxu0 0
    %164 = vmatpush1.bf16.msra.mxu0 0
    %165 = vmatprep.subr.bf16.mxu0 0
    %166 = vmatpush1.bf16.msra.mxu0 0
    %167 = vmatprep.subr.bf16.mxu0 0
    %168 = vmatpush1.bf16.msra.mxu0 0
    %169 = vmatprep.subr.bf16.mxu0 0
    %170 = vmatpush1.bf16.msra.mxu0 0
    %171 = vmatprep.subr.bf16.mxu0 0
    %172 = vmatpush1.bf16.msra.mxu0 0
    %173 = vmatprep.subr.bf16.mxu0 0
    %174 = vmatpush1.bf16.msra.mxu0 0
    %175 = vmatprep.subr.bf16.mxu0 0
    %176 = vmatpush1.bf16.msra.mxu0 0
    %177 = vmatprep.subr.bf16.mxu0 0
    %178 = vmatpush1.bf16.msra.mxu0 0
    %179 = vmatprep.subr.bf16.mxu0 0
    %180 = vmatpush1.bf16.msra.mxu0 0
    %181 = vmatprep.subr.bf16.mxu0 0
    %182 = vmatpush1.bf16.msra.mxu0 0
    %183 = vmatprep.mubr.bf16.mxu0 0
    %184 = vmatmul.mubr.bf16.gmra.mrb[0].mxu0 %v145
    %v185 = vpop.f32.mrb[0].mxu0
    %v186 = vadd.f32 0.0, %v185
    %v187 = vpop.f32.mrb[0].mxu0
    %v188 = vpop.f32.mrb[0].mxu0
    %v189 = vpop.f32.mrb[0].mxu0
    %190 = vdwg.mxu0
    %v191 = vrcp.pop %v142
    %v192 = vmul.f32 %v186, %v191
    %v194 = vunpack.c.l.b16 %v26
    %v195 = vpack.c.b16 %v194, %v194
    %196 = vrot.lane.b32.xlu0 %v195, 96
    %v197 = vpop.permute.xlu0 %196
    %v199 = vsel %vm38, %v197, 0
    %201 = vmatprep.subr.bf16.mxu0 0
    %202 = vmatpush1.bf16.xpose.msra.mxu0 %v43
    %203 = vmatprep.subr.bf16.mxu0 0
    %204 = vmatpush1.bf16.xpose.msra.mxu0 0
    %205 = vmatprep.subr.bf16.mxu0 0
    %206 = vmatpush1.bf16.xpose.msra.mxu0 0
    %207 = vmatprep.subr.bf16.mxu0 0
    %208 = vmatpush1.bf16.xpose.msra.mxu0 0
    %209 = vmatprep.subr.bf16.mxu0 0
    %210 = vmatpush1.bf16.xpose.msra.mxu0 0
    %211 = vmatprep.subr.bf16.mxu0 0
    %212 = vmatpush1.bf16.xpose.msra.mxu0 0
    %213 = vmatprep.subr.bf16.mxu0 0
    %214 = vmatpush1.bf16.xpose.msra.mxu0 0
    %215 = vmatprep.subr.bf16.mxu0 0
    %216 = vmatpush1.bf16.xpose.msra.mxu0 0
    %217 = vmatprep.subr.bf16.mxu0 0
    %218 = vmatpush1.bf16.xpose.msra.mxu0 0
    %219 = vmatprep.subr.bf16.mxu0 0
    %220 = vmatpush1.bf16.xpose.msra.mxu0 0
    %221 = vmatprep.subr.bf16.mxu0 0
    %222 = vmatpush1.bf16.xpose.msra.mxu0 0
    %223 = vmatprep.subr.bf16.mxu0 0
    %224 = vmatpush1.bf16.xpose.msra.mxu0 0
    %225 = vmatprep.subr.bf16.mxu0 0
    %226 = vmatpush1.bf16.xpose.msra.mxu0 0
    %227 = vmatprep.subr.bf16.mxu0 0
    %228 = vmatpush1.bf16.xpose.msra.mxu0 0
    %229 = vmatprep.subr.bf16.mxu0 0
    %230 = vmatpush1.bf16.xpose.msra.mxu0 0
    %231 = vmatprep.subr.bf16.mxu0 0
    %232 = vmatpush1.bf16.xpose.msra.mxu0 0
    %233 = vmatprep.mubr.bf16.mxu0 0
    %234 = vmatmul.mubr.bf16.gmra.mrb[0].mxu0 %v199
    %v235 = vpop.f32.mrb[0].mxu0
    %v236 = vadd.f32 0.0, %v235
    %v237 = vpop.f32.mrb[0].mxu0
    %v238 = vpop.f32.mrb[0].mxu0
    %v239 = vpop.f32.mrb[0].mxu0
    %240 = vdwg.mxu0
    %v242 = vunpack.c.l.b16 %v25
    %v243 = vpack.c.b16 %v242, %v242
    %244 = vrot.lane.b32.xlu0 %v243, 64
    %v245 = vpop.permute.xlu0 %244
    %v247 = vunpack.c.l.b16 %v27
    %v248 = vpack.c.b16 %v247, %v247
    %249 = vrot.lane.b32.xlu0 %v248, 64
    %v250 = vpop.permute.xlu0 %249
    %v252 = vsel %vm85, %v245, 0
    %v255 = vsel %vm85, %v250, 0
    %257 = vmatprep.subr.bf16.mxu0 0
    %258 = vmatpush1.bf16.xpose.msra.mxu0 %v255
    %259 = vmatprep.subr.bf16.mxu0 0
    %260 = vmatpush1.bf16.xpose.msra.mxu0 0
    %261 = vmatprep.subr.bf16.mxu0 0
    %262 = vmatpush1.bf16.xpose.msra.mxu0 0
    %263 = vmatprep.subr.bf16.mxu0 0
    %264 = vmatpush1.bf16.xpose.msra.mxu0 0
    %265 = vmatprep.subr.bf16.mxu0 0
    %266 = vmatpush1.bf16.xpose.msra.mxu0 0
    %267 = vmatprep.subr.bf16.mxu0 0
    %268 = vmatpush1.bf16.xpose.msra.mxu0 0
    %269 = vmatprep.subr.bf16.mxu0 0
    %270 = vmatpush1.bf16.xpose.msra.mxu0 0
    %271 = vmatprep.subr.bf16.mxu0 0
    %272 = vmatpush1.bf16.xpose.msra.mxu0 0
    %273 = vmatprep.subr.bf16.mxu0 0
    %274 = vmatpush1.bf16.xpose.msra.mxu0 0
    %275 = vmatprep.subr.bf16.mxu0 0
    %276 = vmatpush1.bf16.xpose.msra.mxu0 0
    %277 = vmatprep.subr.bf16.mxu0 0
    %278 = vmatpush1.bf16.xpose.msra.mxu0 0
    %279 = vmatprep.subr.bf16.mxu0 0
    %280 = vmatpush1.bf16.xpose.msra.mxu0 0
    %281 = vmatprep.subr.bf16.mxu0 0
    %282 = vmatpush1.bf16.xpose.msra.mxu0 0
    %283 = vmatprep.subr.bf16.mxu0 0
    %284 = vmatpush1.bf16.xpose.msra.mxu0 0
    %285 = vmatprep.subr.bf16.mxu0 0
    %286 = vmatpush1.bf16.xpose.msra.mxu0 0
    %287 = vmatprep.subr.bf16.mxu0 0
    %288 = vmatpush1.bf16.xpose.msra.mxu0 0
    %289 = vmatprep.mubr.bf16.mxu0 0
    %290 = vmatmul.mubr.bf16.gmra.mrb[0].mxu0 %v252
    %v291 = vpop.f32.mrb[0].mxu0
    %v292 = vadd.f32 %v236, %v291
    %v293 = vpop.f32.mrb[0].mxu0
    %v294 = vpop.f32.mrb[0].mxu0
    %v295 = vpop.f32.mrb[0].mxu0
    %296 = vdwg.mxu0
    %v297 = vsel %vm37, %v292, -1e+30
    %v298 = vsel %vm133, %v297, -inf
    %299 = vmax.xlane.f32.xlu0 %v298
    %v300 = vpop.xlane.xlu0 %299
    %v301 = vsub.f32 %v297, %v300
    %v302 = vmul.f32 %v301, 1.442695
    %v303 = vpow.pop %v302
    %v304 = vsel %vm133, %v303, 0.0
    %305 = vadd.xlane.f32.xlu0 %v304
    %v306 = vpop.xlane.xlu0 %305
    %v307 = vpack.c.bf16 %v303, %v303
    %v309 = vunpack.c.l.b16 %v29
    %v310 = vpack.c.b16 %v309, %v309
    %311 = vrot.lane.b32.xlu0 %v310, 64
    %v312 = vpop.permute.xlu0 %311
    %v314 = vsel %vm133, %v307, 0
    %v317 = vsel %vm147, %v312, 0
    %319 = vmatprep.subr.bf16.mxu0 0
    %320 = vmatpush1.bf16.msra.mxu0 %v317
    %321 = vmatprep.subr.bf16.mxu0 0
    %322 = vmatpush1.bf16.msra.mxu0 0
    %323 = vmatprep.subr.bf16.mxu0 0
    %324 = vmatpush1.bf16.msra.mxu0 0
    %325 = vmatprep.subr.bf16.mxu0 0
    %326 = vmatpush1.bf16.msra.mxu0 0
    %327 = vmatprep.subr.bf16.mxu0 0
    %328 = vmatpush1.bf16.msra.mxu0 0
    %329 = vmatprep.subr.bf16.mxu0 0
    %330 = vmatpush1.bf16.msra.mxu0 0
    %331 = vmatprep.subr.bf16.mxu0 0
    %332 = vmatpush1.bf16.msra.mxu0 0
    %333 = vmatprep.subr.bf16.mxu0 0
    %334 = vmatpush1.bf16.msra.mxu0 0
    %335 = vmatprep.subr.bf16.mxu0 0
    %336 = vmatpush1.bf16.msra.mxu0 0
    %337 = vmatprep.subr.bf16.mxu0 0
    %338 = vmatpush1.bf16.msra.mxu0 0
    %339 = vmatprep.subr.bf16.mxu0 0
    %340 = vmatpush1.bf16.msra.mxu0 0
    %341 = vmatprep.subr.bf16.mxu0 0
    %342 = vmatpush1.bf16.msra.mxu0 0
    %343 = vmatprep.subr.bf16.mxu0 0
    %344 = vmatpush1.bf16.msra.mxu0 0
    %345 = vmatprep.subr.bf16.mxu0 0
    %346 = vmatpush1.bf16.msra.mxu0 0
    %347 = vmatprep.subr.bf16.mxu0 0
    %348 = vmatpush1.bf16.msra.mxu0 0
    %349 = vmatprep.subr.bf16.mxu0 0
    %350 = vmatpush1.bf16.msra.mxu0 0
    %351 = vmatprep.mubr.bf16.mxu0 0
    %352 = vmatmul.mubr.bf16.gmra.mrb[0].mxu0 %v314
    %v353 = vpop.f32.mrb[0].mxu0
    %v354 = vadd.f32 0.0, %v353
    %v355 = vpop.f32.mrb[0].mxu0
    %v356 = vpop.f32.mrb[0].mxu0
    %v357 = vpop.f32.mrb[0].mxu0
    %358 = vdwg.mxu0
    %v359 = vrcp.pop %v306
    %v360 = vmul.f32 %v354, %v359
    %362 = vrot.lane.b32.xlu0 %v360, 64
    %v363 = vpop.permute.xlu0 %362
    %v365 = vsel %vm85, %v192, %v363
    %v366 = vpack.c.bf16 %v365, %v365
    %v367 = vld [vmem:[%s5] sm:$0xf]
    %v368 = vld [vmem:[%s5 + $0x4] sm:$0xf]
    %v369 = vld [vmem:[%s5 + $0x8] sm:$0xf]
    %v370 = vld [vmem:[%s5 + $0xc] sm:$0xf]
    %v371 = vld [vmem:[%s5 + $0x10] sm:$0xf]
    %v372 = vld [vmem:[%s5 + $0x14] sm:$0xf]
    %v373 = vld [vmem:[%s5 + $0x18] sm:$0xf]
    %v374 = vld [vmem:[%s5 + $0x1c] sm:$0xf]
    %v375 = vld [vmem:[%s5 + $0x20] sm:$0xf]
    %v376 = vld [vmem:[%s5 + $0x24] sm:$0xf]
    %v377 = vld [vmem:[%s5 + $0x28] sm:$0xf]
    %v378 = vld [vmem:[%s5 + $0x2c] sm:$0xf]
    %v379 = vld [vmem:[%s5 + $0x30] sm:$0xf]
    %v380 = vld [vmem:[%s5 + $0x34] sm:$0xf]
    %v381 = vld [vmem:[%s5 + $0x38] sm:$0xf]
    %v382 = vld [vmem:[%s5 + $0x3c] sm:$0xf]
    %v399 = vunpack.c.l.b16 %v367
    %v400 = vunpack.c.l.b16 %v368
    %v401 = vunpack.c.l.b16 %v369
    %v402 = vunpack.c.l.b16 %v370
    %v403 = vunpack.c.l.b16 %v371
    %v404 = vunpack.c.l.b16 %v372
    %v405 = vunpack.c.l.b16 %v373
    %v406 = vunpack.c.l.b16 %v374
    %v407 = vunpack.c.l.b16 %v375
    %v408 = vunpack.c.l.b16 %v376
    %v409 = vunpack.c.l.b16 %v377
    %v410 = vunpack.c.l.b16 %v378
    %v411 = vunpack.c.l.b16 %v379
    %v412 = vunpack.c.l.b16 %v380
    %v413 = vunpack.c.l.b16 %v381
    %v414 = vunpack.c.l.b16 %v382
    %v415 = vpack.c.b16 %v400, %v399
    %v416 = vpack.c.b16 %v402, %v401
    %v417 = vpack.c.b16 %v404, %v403
    %v418 = vpack.c.b16 %v406, %v405
    %v419 = vpack.c.b16 %v408, %v407
    %v420 = vpack.c.b16 %v410, %v409
    %v421 = vpack.c.b16 %v412, %v411
    %v422 = vpack.c.b16 %v414, %v413
    %431 = vmatprep.subr.bf16.mxu0 0
    %432 = vmatpush1.bf16.msra.mxu0 %v415
    %433 = vmatprep.subr.bf16.mxu0 0
    %434 = vmatpush1.bf16.msra.mxu0 %v416
    %435 = vmatprep.subr.bf16.mxu0 0
    %436 = vmatpush1.bf16.msra.mxu0 %v417
    %437 = vmatprep.subr.bf16.mxu0 0
    %438 = vmatpush1.bf16.msra.mxu0 %v418
    %439 = vmatprep.subr.bf16.mxu0 0
    %440 = vmatpush1.bf16.msra.mxu0 %v419
    %441 = vmatprep.subr.bf16.mxu0 0
    %442 = vmatpush1.bf16.msra.mxu0 %v420
    %443 = vmatprep.subr.bf16.mxu0 0
    %444 = vmatpush1.bf16.msra.mxu0 %v421
    %445 = vmatprep.subr.bf16.mxu0 0
    %446 = vmatpush1.bf16.msra.mxu0 %v422
    %447 = vmatprep.subr.bf16.mxu0 0
    %448 = vmatpush1.bf16.msra.mxu0 0
    %449 = vmatprep.subr.bf16.mxu0 0
    %450 = vmatpush1.bf16.msra.mxu0 0
    %451 = vmatprep.subr.bf16.mxu0 0
    %452 = vmatpush1.bf16.msra.mxu0 0
    %453 = vmatprep.subr.bf16.mxu0 0
    %454 = vmatpush1.bf16.msra.mxu0 0
    %455 = vmatprep.subr.bf16.mxu0 0
    %456 = vmatpush1.bf16.msra.mxu0 0
    %457 = vmatprep.subr.bf16.mxu0 0
    %458 = vmatpush1.bf16.msra.mxu0 0
    %459 = vmatprep.subr.bf16.mxu0 0
    %460 = vmatpush1.bf16.msra.mxu0 0
    %461 = vmatprep.subr.bf16.mxu0 0
    %462 = vmatpush1.bf16.msra.mxu0 0
    %463 = vmatprep.mubr.bf16.mxu0 0
    %464 = vmatmul.mubr.bf16.gmra.mrb[0].mxu0 %v366
    %v465 = vpop.f32.mrb[0].mxu0
    %v466 = vadd.f32 0.0, %v465
    %v467 = vpop.f32.mrb[0].mxu0
    %v468 = vpop.f32.mrb[0].mxu0
    %v469 = vpop.f32.mrb[0].mxu0
    %470 = vdwg.mxu0
    %471 = vst [vmem:[#allocation2] sm:$0xff] %v466
    // Predicated region
    $region26: #{deepseek_v3_mla_forward.3} parent=1 // pred_check
      _
    $region27: #{deepseek_v3_mla_forward.3} parent=1 // pred_check_branch
      %473 = sbr.rel (0) target = $region29
    $region28: #{deepseek_v3_mla_forward.3} parent=1 // pred_region
      %s475 = ssub.s32 128, 128
      %476 = vsyncadd [#allocation3], %s475
      %s478 = sshll.u32 [#allocation2], 4
      %s479 = int_to_ptr.vmem [resolvable:$true] %s478
      %481 = dma.vmem_to_hbm [thread:$0]  %s479, 128, %s6, [#allocation3]
    $region29: #{deepseek_v3_mla_forward.3} parent=1 // pred_fallthru
      _
    // Predicated region
    $region30: #{deepseek_v3_mla_forward.3} parent=1 // pred_check
      _
    $region31: #{deepseek_v3_mla_forward.3} parent=1 // pred_check_branch
      %483 = sbr.rel (0) target = $region33
    $region32: #{deepseek_v3_mla_forward.3} parent=1 // pred_region
      %484 = dma.done [#allocation3], 128
    $region33: #{deepseek_v3_mla_forward.3} parent=1 // pred_fallthru
      _
    %485 = vsyncpa [#allocation3], 1

// kernel: deepseek_v3_mla_forward.2
$region0: #{deepseek_v3_mla_forward.2}
  #allocation0 [shape = 'u32[]', space=smem, size = 0x4, offset = 0x4, fixed_abs, tag = 'smem constant byte address 0x4 - core index']
  #allocation1 [shape = 'u32[144,128]{1,0:T(1,128)}', space=vmem, size = 0x12000, scoped, tag = 'internal scratch']
  %s0 = inlined_call_operand.vmem [shape: bf16[8,128], index: 0, kind: input, shape index: {}]
  %s1 = inlined_call_operand.vmem [shape: bf16[128,64], index: 1, kind: input, shape index: {}]
  %s2 = inlined_call_operand.vmem [shape: f32[1,64], index: 2, kind: input, shape index: {}]
  %s3 = inlined_call_operand.vmem [shape: bf16[64,128], index: 3, kind: input, shape index: {}]
  %s4 = inlined_call_operand.hbm [shape: bf16[64,64], index: 4, kind: input, shape index: {}]
  %s5 = inlined_call_operand.vmem [shape: bf16[128,128], index: 5, kind: input, shape index: {}]
  %s6 = inlined_call_operand.vmem [shape: bf16[128,32], index: 6, kind: input, shape index: {}]
  %s7 = inlined_call_operand.vmem [shape: f32[1,128], index: 7, kind: input, shape index: {}]
  %s8 = inlined_call_operand.vmem [shape: bf16[128,128], index: 8, kind: input, shape index: {}]
  %s9 = inlined_call_operand.vmem [shape: bf16[128,128], index: 9, kind: input, shape index: {}]
  %s10 = inlined_call_operand.vmem [shape: f32[8,16], index: 10, kind: input, shape index: {}]
  %s11 = inlined_call_operand.vmem [shape: f32[8,16], index: 11, kind: input, shape index: {}]
  %s12 = inlined_call_operand.vmem [shape: bf16[8,128], index: 12, kind: output, shape index: {0}]
  %s13 = inlined_call_operand.vmem [shape: bf16[8,64], index: 13, kind: output, shape index: {1}]
  %s14 = inlined_call_operand.vmem [shape: bf16[8,128], index: 14, kind: output, shape index: {2}]
  %s15 = inlined_call_operand.vmem [shape: bf16[8,32], index: 15, kind: output, shape index: {3}]
  %s16 = inlined_call_operand.vmem [shape: bf16[8,128], index: 16, kind: output, shape index: {4}]
  %17 = xla_tuple %s12, %s13, %s14, %s15, %s16
  %s18 = sld [smem:[#allocation0]]
  $region94: #{deepseek_v3_mla_forward.2} parent=0
    _
  %s20 = ssub.s32 1, %s18
  %s21 = scalar_select 0, %s20, %s18
  $region1: #{deepseek_v3_mla_forward.2} parent=0
    #allocation2 [shape = 'u8[16384]{0}', space=vmem, size = 0x4000, scoped, tag = 'input window, operand 4, single buffered']
    #allocation3 [shape = 's32[1]{0}', space=sflag, size = 0x4, scoped, tag = 'scoped memory for deepseek_v3_mla_forward.2']
    %22 = vsyncpa [#allocation3], 0
    // Predicated region
    $region2: #{deepseek_v3_mla_forward.2} parent=1 // pred_check
      _
    $region3: #{deepseek_v3_mla_forward.2} parent=1 // pred_check_branch
      %24 = sbr.rel (0) target = $region5
    $region4: #{deepseek_v3_mla_forward.2} parent=1 // pred_region
      _
    $region5: #{deepseek_v3_mla_forward.2} parent=1 // pred_fallthru
      _
    // Predicated region
    $region6: #{deepseek_v3_mla_forward.2} parent=1 // pred_check
      _
    $region7: #{deepseek_v3_mla_forward.2} parent=1 // pred_check_branch
      %26 = sbr.rel (0) target = $region9
    $region8: #{deepseek_v3_mla_forward.2} parent=1 // pred_region
      _
    $region9: #{deepseek_v3_mla_forward.2} parent=1 // pred_fallthru
      _
    // Predicated region
    $region10: #{deepseek_v3_mla_forward.2} parent=1 // pred_check
      _
    $region11: #{deepseek_v3_mla_forward.2} parent=1 // pred_check_branch
      %28 = sbr.rel (0) target = $region13
    $region12: #{deepseek_v3_mla_forward.2} parent=1 // pred_region
      _
    $region13: #{deepseek_v3_mla_forward.2} parent=1 // pred_fallthru
      _
    // Predicated region
    $region14: #{deepseek_v3_mla_forward.2} parent=1 // pred_check
      _
    $region15: #{deepseek_v3_mla_forward.2} parent=1 // pred_check_branch
      %30 = sbr.rel (0) target = $region17
    $region16: #{deepseek_v3_mla_forward.2} parent=1 // pred_region
      _
    $region17: #{deepseek_v3_mla_forward.2} parent=1 // pred_fallthru
      _
    // Predicated region
    $region18: #{deepseek_v3_mla_forward.2} parent=1 // pred_check
      _
    $region19: #{deepseek_v3_mla_forward.2} parent=1 // pred_check_branch
      %32 = sbr.rel (0) target = $region21
    $region20: #{deepseek_v3_mla_forward.2} parent=1 // pred_region
      %s34 = ssub.s32 512, 512
      %35 = vsyncadd [#allocation3], %s34
      %s36 = sshll.u32 [#allocation2], 4
      %s37 = int_to_ptr.vmem [resolvable:$true] %s36
      %42 = dma.hbm_to_vmem [thread:$0]  %s4, 512, %s37, [#allocation3], 64, 64, 4
    $region21: #{deepseek_v3_mla_forward.2} parent=1 // pred_fallthru
      _
    // Predicated region
    $region22: #{deepseek_v3_mla_forward.2} parent=1 // pred_check
      _
    $region23: #{deepseek_v3_mla_forward.2} parent=1 // pred_check_branch
      %44 = sbr.rel (0) target = $region25
    $region24: #{deepseek_v3_mla_forward.2} parent=1 // pred_region
      _
    $region25: #{deepseek_v3_mla_forward.2} parent=1 // pred_fallthru
      _
    // Predicated region
    $region26: #{deepseek_v3_mla_forward.2} parent=1 // pred_check
      _
    $region27: #{deepseek_v3_mla_forward.2} parent=1 // pred_check_branch
      %46 = sbr.rel (0) target = $region29
    $region28: #{deepseek_v3_mla_forward.2} parent=1 // pred_region
      _
    $region29: #{deepseek_v3_mla_forward.2} parent=1 // pred_fallthru
      _
    // Predicated region
    $region30: #{deepseek_v3_mla_forward.2} parent=1 // pred_check
      _
    $region31: #{deepseek_v3_mla_forward.2} parent=1 // pred_check_branch
      %48 = sbr.rel (0) target = $region33
    $region32: #{deepseek_v3_mla_forward.2} parent=1 // pred_region
      _
    $region33: #{deepseek_v3_mla_forward.2} parent=1 // pred_fallthru
      _
    // Predicated region
    $region34: #{deepseek_v3_mla_forward.2} parent=1 // pred_check
      _
    $region35: #{deepseek_v3_mla_forward.2} parent=1 // pred_check_branch
      %50 = sbr.rel (0) target = $region37
    $region36: #{deepseek_v3_mla_forward.2} parent=1 // pred_region
      _
    $region37: #{deepseek_v3_mla_forward.2} parent=1 // pred_fallthru
      _
    // Predicated region
    $region38: #{deepseek_v3_mla_forward.2} parent=1 // pred_check
      _
    $region39: #{deepseek_v3_mla_forward.2} parent=1 // pred_check_branch
      %52 = sbr.rel (0) target = $region41
    $region40: #{deepseek_v3_mla_forward.2} parent=1 // pred_region
      _
    $region41: #{deepseek_v3_mla_forward.2} parent=1 // pred_fallthru
      _
    // Predicated region
    $region42: #{deepseek_v3_mla_forward.2} parent=1 // pred_check
      _
    $region43: #{deepseek_v3_mla_forward.2} parent=1 // pred_check_branch
      %54 = sbr.rel (0) target = $region45
    $region44: #{deepseek_v3_mla_forward.2} parent=1 // pred_region
      _
    $region45: #{deepseek_v3_mla_forward.2} parent=1 // pred_fallthru
      _
    // Predicated region
    $region46: #{deepseek_v3_mla_forward.2} parent=1 // pred_check
      _
    $region47: #{deepseek_v3_mla_forward.2} parent=1 // pred_check_branch
      %56 = sbr.rel (0) target = $region49
    $region48: #{deepseek_v3_mla_forward.2} parent=1 // pred_region
      _
    $region49: #{deepseek_v3_mla_forward.2} parent=1 // pred_fallthru
      _
    // Predicated region
    $region50: #{deepseek_v3_mla_forward.2} parent=1 // pred_check
      _
    $region51: #{deepseek_v3_mla_forward.2} parent=1 // pred_check_branch
      %58 = sbr.rel (0) target = $region53
    $region52: #{deepseek_v3_mla_forward.2} parent=1 // pred_region
      %59 = dma.done [#allocation3], 512
    $region53: #{deepseek_v3_mla_forward.2} parent=1 // pred_fallthru
      _
    %v61 = vld [vmem:[%s0] sm:$0xf]
    %v62 = vld [vmem:[%s1] sm:$0xf]
    %v63 = vld [vmem:[%s1 + $0x4] sm:$0xf]
    %v64 = vld [vmem:[%s1 + $0x8] sm:$0xf]
    %v65 = vld [vmem:[%s1 + $0xc] sm:$0xf]
    %v66 = vld [vmem:[%s1 + $0x10] sm:$0xf]
    %v67 = vld [vmem:[%s1 + $0x14] sm:$0xf]
    %v68 = vld [vmem:[%s1 + $0x18] sm:$0xf]
    %v69 = vld [vmem:[%s1 + $0x1c] sm:$0xf]
    %v70 = vld [vmem:[%s1 + $0x20] sm:$0xf]
    %v71 = vld [vmem:[%s1 + $0x24] sm:$0xf]
    %v72 = vld [vmem:[%s1 + $0x28] sm:$0xf]
    %v73 = vld [vmem:[%s1 + $0x2c] sm:$0xf]
    %v74 = vld [vmem:[%s1 + $0x30] sm:$0xf]
    %v75 = vld [vmem:[%s1 + $0x34] sm:$0xf]
    %v76 = vld [vmem:[%s1 + $0x38] sm:$0xf]
    %v77 = vld [vmem:[%s1 + $0x3c] sm:$0xf]
    %v94 = vunpack.c.l.b16 %v62
    %v95 = vunpack.c.l.b16 %v63
    %v96 = vunpack.c.l.b16 %v64
    %v97 = vunpack.c.l.b16 %v65
    %v98 = vunpack.c.l.b16 %v66
    %v99 = vunpack.c.l.b16 %v67
    %v100 = vunpack.c.l.b16 %v68
    %v101 = vunpack.c.l.b16 %v69
    %v102 = vunpack.c.l.b16 %v70
    %v103 = vunpack.c.l.b16 %v71
    %v104 = vunpack.c.l.b16 %v72
    %v105 = vunpack.c.l.b16 %v73
    %v106 = vunpack.c.l.b16 %v74
    %v107 = vunpack.c.l.b16 %v75
    %v108 = vunpack.c.l.b16 %v76
    %v109 = vunpack.c.l.b16 %v77
    %v110 = vpack.c.b16 %v95, %v94
    %v111 = vpack.c.b16 %v97, %v96
    %v112 = vpack.c.b16 %v99, %v98
    %v113 = vpack.c.b16 %v101, %v100
    %v114 = vpack.c.b16 %v103, %v102
    %v115 = vpack.c.b16 %v105, %v104
    %v116 = vpack.c.b16 %v107, %v106
    %v117 = vpack.c.b16 %v109, %v108
    %126 = vmatprep.subr.bf16.mxu0 0
    %127 = vmatpush1.bf16.msra.mxu0 %v110
    %128 = vmatprep.subr.bf16.mxu0 0
    %129 = vmatpush1.bf16.msra.mxu0 %v111
    %130 = vmatprep.subr.bf16.mxu0 0
    %131 = vmatpush1.bf16.msra.mxu0 %v112
    %132 = vmatprep.subr.bf16.mxu0 0
    %133 = vmatpush1.bf16.msra.mxu0 %v113
    %134 = vmatprep.subr.bf16.mxu0 0
    %135 = vmatpush1.bf16.msra.mxu0 %v114
    %136 = vmatprep.subr.bf16.mxu0 0
    %137 = vmatpush1.bf16.msra.mxu0 %v115
    %138 = vmatprep.subr.bf16.mxu0 0
    %139 = vmatpush1.bf16.msra.mxu0 %v116
    %140 = vmatprep.subr.bf16.mxu0 0
    %141 = vmatpush1.bf16.msra.mxu0 %v117
    %142 = vmatprep.subr.bf16.mxu0 0
    %143 = vmatpush1.bf16.msra.mxu0 0
    %144 = vmatprep.subr.bf16.mxu0 0
    %145 = vmatpush1.bf16.msra.mxu0 0
    %146 = vmatprep.subr.bf16.mxu0 0
    %147 = vmatpush1.bf16.msra.mxu0 0
    %148 = vmatprep.subr.bf16.mxu0 0
    %149 = vmatpush1.bf16.msra.mxu0 0
    %150 = vmatprep.subr.bf16.mxu0 0
    %151 = vmatpush1.bf16.msra.mxu0 0
    %152 = vmatprep.subr.bf16.mxu0 0
    %153 = vmatpush1.bf16.msra.mxu0 0
    %154 = vmatprep.subr.bf16.mxu0 0
    %155 = vmatpush1.bf16.msra.mxu0 0
    %156 = vmatprep.subr.bf16.mxu0 0
    %157 = vmatpush1.bf16.msra.mxu0 0
    %158 = vmatprep.mubr.bf16.mxu0 0
    %159 = vmatmul.mubr.bf16.gmra.mrb[0].mxu0 %v61
    %v160 = vpop.f32.mrb[0].mxu0
    %v161 = vadd.f32 0.0, %v160
    %v162 = vpop.f32.mrb[0].mxu0
    %v163 = vpop.f32.mrb[0].mxu0
    %v164 = vpop.f32.mrb[0].mxu0
    %165 = vdwg.mxu0
    %v166 = vld [vmem:[%s2] sm:$0x1]
    %v167 = vmul.f32 %v161, %v161
    %vm168 = vcmask 523264
    %v169 = vsel %vm168, %v167, 0.0
    %170 = vadd.xlane.f32.xlu0 %v169
    %v171 = vpop.xlane.xlu0 %170
    %v172 = vrcp.pop 64.0
    %v173 = vmul.f32 %v171, %v172
    %v174 = vadd.f32 %v173, 1e-06
    %v175 = vrsqrt.pop %v174
    %v176 = vmul.f32 %v161, %v175
    %v178 = vlaneseq
    %v179 = vshrl.u32 %v178, 7
    %v180 = vsub.s32 0, %v179
    %v181 = vrot.slane %v166, %v180
    %v183 = vmul.f32 %v176, %v181
    %v184 = vpack.c.bf16 %v183, %v183
    %v185 = vld [vmem:[%s3] sm:$0xf]
    %v186 = vld [vmem:[%s3 + $0x4] sm:$0xf]
    %v187 = vld [vmem:[%s3 + $0x8] sm:$0xf]
    %v188 = vld [vmem:[%s3 + $0xc] sm:$0xf]
    %v189 = vld [vmem:[%s3 + $0x10] sm:$0xf]
    %v190 = vld [vmem:[%s3 + $0x14] sm:$0xf]
    %v191 = vld [vmem:[%s3 + $0x18] sm:$0xf]
    %v192 = vld [vmem:[%s3 + $0x1c] sm:$0xf]
    %v201 = vunpack.c.l.b16 %v185
    %v202 = vunpack.c.l.b16 %v186
    %v203 = vunpack.c.l.b16 %v187
    %v204 = vunpack.c.l.b16 %v188
    %v205 = vunpack.c.l.b16 %v189
    %v206 = vunpack.c.l.b16 %v190
    %v207 = vunpack.c.l.b16 %v191
    %v208 = vunpack.c.l.b16 %v192
    %v209 = vpack.c.b16 %v202, %v201
    %v210 = vpack.c.b16 %v204, %v203
    %v211 = vpack.c.b16 %v206, %v205
    %v212 = vpack.c.b16 %v208, %v207
    %v218 = vsel %vm168, %v184, 0
    %220 = vmatprep.subr.bf16.mxu0 0
    %221 = vmatpush1.bf16.msra.mxu0 %v209
    %222 = vmatprep.subr.bf16.mxu0 0
    %223 = vmatpush1.bf16.msra.mxu0 %v210
    %224 = vmatprep.subr.bf16.mxu0 0
    %225 = vmatpush1.bf16.msra.mxu0 %v211
    %226 = vmatprep.subr.bf16.mxu0 0
    %227 = vmatpush1.bf16.msra.mxu0 %v212
    %228 = vmatprep.subr.bf16.mxu0 0
    %229 = vmatpush1.bf16.msra.mxu0 0
    %230 = vmatprep.subr.bf16.mxu0 0
    %231 = vmatpush1.bf16.msra.mxu0 0
    %232 = vmatprep.subr.bf16.mxu0 0
    %233 = vmatpush1.bf16.msra.mxu0 0
    %234 = vmatprep.subr.bf16.mxu0 0
    %235 = vmatpush1.bf16.msra.mxu0 0
    %236 = vmatprep.subr.bf16.mxu0 0
    %237 = vmatpush1.bf16.msra.mxu0 0
    %238 = vmatprep.subr.bf16.mxu0 0
    %239 = vmatpush1.bf16.msra.mxu0 0
    %240 = vmatprep.subr.bf16.mxu0 0
    %241 = vmatpush1.bf16.msra.mxu0 0
    %242 = vmatprep.subr.bf16.mxu0 0
    %243 = vmatpush1.bf16.msra.mxu0 0
    %244 = vmatprep.subr.bf16.mxu0 0
    %245 = vmatpush1.bf16.msra.mxu0 0
    %246 = vmatprep.subr.bf16.mxu0 0
    %247 = vmatpush1.bf16.msra.mxu0 0
    %248 = vmatprep.subr.bf16.mxu0 0
    %249 = vmatpush1.bf16.msra.mxu0 0
    %250 = vmatprep.subr.bf16.mxu0 0
    %251 = vmatpush1.bf16.msra.mxu0 0
    %252 = vmatprep.mubr.bf16.mxu0 0
    %253 = vmatmul.mubr.bf16.gmra.mrb[0].mxu0 %v218
    %v254 = vpop.f32.mrb[0].mxu0
    %v255 = vadd.f32 0.0, %v254
    %v256 = vpop.f32.mrb[0].mxu0
    %v257 = vpop.f32.mrb[0].mxu0
    %v258 = vpop.f32.mrb[0].mxu0
    %259 = vdwg.mxu0
    %v260 = vpack.c.bf16 %v255, %v255
    %261 = vst [vmem:[%s12] sm:$0xf] %v260
    %v262 = vld [vmem:[#allocation2] sm:$0xf]
    %v263 = vld [vmem:[#allocation2 + $0x4] sm:$0xf]
    %v264 = vld [vmem:[#allocation2 + $0x8] sm:$0xf]
    %v265 = vld [vmem:[#allocation2 + $0xc] sm:$0xf]
    %v266 = vld [vmem:[#allocation2 + $0x10] sm:$0xf]
    %v267 = vld [vmem:[#allocation2 + $0x14] sm:$0xf]
    %v268 = vld [vmem:[#allocation2 + $0x18] sm:$0xf]
    %v269 = vld [vmem:[#allocation2 + $0x1c] sm:$0xf]
    %v278 = vunpack.c.l.b16 %v262
    %v279 = vunpack.c.l.b16 %v263
    %v280 = vunpack.c.l.b16 %v264
    %v281 = vunpack.c.l.b16 %v265
    %v282 = vunpack.c.l.b16 %v266
    %v283 = vunpack.c.l.b16 %v267
    %v284 = vunpack.c.l.b16 %v268
    %v285 = vunpack.c.l.b16 %v269
    %v286 = vpack.c.b16 %v279, %v278
    %v287 = vpack.c.b16 %v281, %v280
    %v288 = vpack.c.b16 %v283, %v282
    %v289 = vpack.c.b16 %v285, %v284
    %294 = vmatprep.subr.bf16.mxu0 0
    %295 = vmatpush1.bf16.msra.mxu0 %v286
    %296 = vmatprep.subr.bf16.mxu0 0
    %297 = vmatpush1.bf16.msra.mxu0 %v287
    %298 = vmatprep.subr.bf16.mxu0 0
    %299 = vmatpush1.bf16.msra.mxu0 %v288
    %300 = vmatprep.subr.bf16.mxu0 0
    %301 = vmatpush1.bf16.msra.mxu0 %v289
    %302 = vmatprep.subr.bf16.mxu0 0
    %303 = vmatpush1.bf16.msra.mxu0 0
    %304 = vmatprep.subr.bf16.mxu0 0
    %305 = vmatpush1.bf16.msra.mxu0 0
    %306 = vmatprep.subr.bf16.mxu0 0
    %307 = vmatpush1.bf16.msra.mxu0 0
    %308 = vmatprep.subr.bf16.mxu0 0
    %309 = vmatpush1.bf16.msra.mxu0 0
    %310 = vmatprep.subr.bf16.mxu0 0
    %311 = vmatpush1.bf16.msra.mxu0 0
    %312 = vmatprep.subr.bf16.mxu0 0
    %313 = vmatpush1.bf16.msra.mxu0 0
    %314 = vmatprep.subr.bf16.mxu0 0
    %315 = vmatpush1.bf16.msra.mxu0 0
    %316 = vmatprep.subr.bf16.mxu0 0
    %317 = vmatpush1.bf16.msra.mxu0 0
    %318 = vmatprep.subr.bf16.mxu0 0
    %319 = vmatpush1.bf16.msra.mxu0 0
    %320 = vmatprep.subr.bf16.mxu0 0
    %321 = vmatpush1.bf16.msra.mxu0 0
    %322 = vmatprep.subr.bf16.mxu0 0
    %323 = vmatpush1.bf16.msra.mxu0 0
    %324 = vmatprep.subr.bf16.mxu0 0
    %325 = vmatpush1.bf16.msra.mxu0 0
    %326 = vmatprep.mubr.bf16.mxu0 0
    %327 = vmatmul.mubr.bf16.gmra.mrb[0].mxu0 %v218
    %v328 = vpop.f32.mrb[0].mxu0
    %v329 = vadd.f32 0.0, %v328
    %v330 = vpop.f32.mrb[0].mxu0
    %v331 = vpop.f32.mrb[0].mxu0
    %v332 = vpop.f32.mrb[0].mxu0
    %333 = vdwg.mxu0
    %v334 = vld [vmem:[%s5] sm:$0xf]
    %v335 = vld [vmem:[%s5 + $0x4] sm:$0xf]
    %v336 = vld [vmem:[%s5 + $0x8] sm:$0xf]
    %v337 = vld [vmem:[%s5 + $0xc] sm:$0xf]
    %v338 = vld [vmem:[%s5 + $0x10] sm:$0xf]
    %v339 = vld [vmem:[%s5 + $0x14] sm:$0xf]
    %v340 = vld [vmem:[%s5 + $0x18] sm:$0xf]
    %v341 = vld [vmem:[%s5 + $0x1c] sm:$0xf]
    %v342 = vld [vmem:[%s5 + $0x20] sm:$0xf]
    %v343 = vld [vmem:[%s5 + $0x24] sm:$0xf]
    %v344 = vld [vmem:[%s5 + $0x28] sm:$0xf]
    %v345 = vld [vmem:[%s5 + $0x2c] sm:$0xf]
    %v346 = vld [vmem:[%s5 + $0x30] sm:$0xf]
    %v347 = vld [vmem:[%s5 + $0x34] sm:$0xf]
    %v348 = vld [vmem:[%s5 + $0x38] sm:$0xf]
    %v349 = vld [vmem:[%s5 + $0x3c] sm:$0xf]
    %v366 = vunpack.c.l.b16 %v334
    %v367 = vunpack.c.l.b16 %v335
    %v368 = vunpack.c.l.b16 %v336
    %v369 = vunpack.c.l.b16 %v337
    %v370 = vunpack.c.l.b16 %v338
    %v371 = vunpack.c.l.b16 %v339
    %v372 = vunpack.c.l.b16 %v340
    %v373 = vunpack.c.l.b16 %v341
    %v374 = vunpack.c.l.b16 %v342
    %v375 = vunpack.c.l.b16 %v343
    %v376 = vunpack.c.l.b16 %v344
    %v377 = vunpack.c.l.b16 %v345
    %v378 = vunpack.c.l.b16 %v346
    %v379 = vunpack.c.l.b16 %v347
    %v380 = vunpack.c.l.b16 %v348
    %v381 = vunpack.c.l.b16 %v349
    %v382 = vpack.c.b16 %v367, %v366
    %v383 = vpack.c.b16 %v369, %v368
    %v384 = vpack.c.b16 %v371, %v370
    %v385 = vpack.c.b16 %v373, %v372
    %v386 = vpack.c.b16 %v375, %v374
    %v387 = vpack.c.b16 %v377, %v376
    %v388 = vpack.c.b16 %v379, %v378
    %v389 = vpack.c.b16 %v381, %v380
    %398 = vmatprep.subr.bf16.mxu0 0
    %399 = vmatpush1.bf16.msra.mxu0 %v382
    %400 = vmatprep.subr.bf16.mxu0 0
    %401 = vmatpush1.bf16.msra.mxu0 %v383
    %402 = vmatprep.subr.bf16.mxu0 0
    %403 = vmatpush1.bf16.msra.mxu0 %v384
    %404 = vmatprep.subr.bf16.mxu0 0
    %405 = vmatpush1.bf16.msra.mxu0 %v385
    %406 = vmatprep.subr.bf16.mxu0 0
    %407 = vmatpush1.bf16.msra.mxu0 %v386
    %408 = vmatprep.subr.bf16.mxu0 0
    %409 = vmatpush1.bf16.msra.mxu0 %v387
    %410 = vmatprep.subr.bf16.mxu0 0
    %411 = vmatpush1.bf16.msra.mxu0 %v388
    %412 = vmatprep.subr.bf16.mxu0 0
    %413 = vmatpush1.bf16.msra.mxu0 %v389
    %414 = vmatprep.subr.bf16.mxu0 0
    %415 = vmatpush1.bf16.msra.mxu0 0
    %416 = vmatprep.subr.bf16.mxu0 0
    %417 = vmatpush1.bf16.msra.mxu0 0
    %418 = vmatprep.subr.bf16.mxu0 0
    %419 = vmatpush1.bf16.msra.mxu0 0
    %420 = vmatprep.subr.bf16.mxu0 0
    %421 = vmatpush1.bf16.msra.mxu0 0
    %422 = vmatprep.subr.bf16.mxu0 0
    %423 = vmatpush1.bf16.msra.mxu0 0
    %424 = vmatprep.subr.bf16.mxu0 0
    %425 = vmatpush1.bf16.msra.mxu0 0
    %426 = vmatprep.subr.bf16.mxu0 0
    %427 = vmatpush1.bf16.msra.mxu0 0
    %428 = vmatprep.subr.bf16.mxu0 0
    %429 = vmatpush1.bf16.msra.mxu0 0
    %430 = vmatprep.mubr.bf16.mxu0 0
    %431 = vmatmul.mubr.bf16.gmra.mrb[0].mxu0 %v61
    %v432 = vpop.f32.mrb[0].mxu0
    %v433 = vadd.f32 0.0, %v432
    %v434 = vpop.f32.mrb[0].mxu0
    %v435 = vpop.f32.mrb[0].mxu0
    %v436 = vpop.f32.mrb[0].mxu0
    %437 = vdwg.mxu0
    %v438 = vld [vmem:[%s6] sm:$0xf]
    %v439 = vld [vmem:[%s6 + $0x4] sm:$0xf]
    %v440 = vld [vmem:[%s6 + $0x8] sm:$0xf]
    %v441 = vld [vmem:[%s6 + $0xc] sm:$0xf]
    %v442 = vld [vmem:[%s6 + $0x10] sm:$0xf]
    %v443 = vld [vmem:[%s6 + $0x14] sm:$0xf]
    %v444 = vld [vmem:[%s6 + $0x18] sm:$0xf]
    %v445 = vld [vmem:[%s6 + $0x1c] sm:$0xf]
    %v446 = vld [vmem:[%s6 + $0x20] sm:$0xf]
    %v447 = vld [vmem:[%s6 + $0x24] sm:$0xf]
    %v448 = vld [vmem:[%s6 + $0x28] sm:$0xf]
    %v449 = vld [vmem:[%s6 + $0x2c] sm:$0xf]
    %v450 = vld [vmem:[%s6 + $0x30] sm:$0xf]
    %v451 = vld [vmem:[%s6 + $0x34] sm:$0xf]
    %v452 = vld [vmem:[%s6 + $0x38] sm:$0xf]
    %v453 = vld [vmem:[%s6 + $0x3c] sm:$0xf]
    %v470 = vunpack.c.l.b16 %v438
    %v471 = vunpack.c.l.b16 %v439
    %v472 = vunpack.c.l.b16 %v440
    %v473 = vunpack.c.l.b16 %v441
    %v474 = vunpack.c.l.b16 %v442
    %v475 = vunpack.c.l.b16 %v443
    %v476 = vunpack.c.l.b16 %v444
    %v477 = vunpack.c.l.b16 %v445
    %v478 = vunpack.c.l.b16 %v446
    %v479 = vunpack.c.l.b16 %v447
    %v480 = vunpack.c.l.b16 %v448
    %v481 = vunpack.c.l.b16 %v449
    %v482 = vunpack.c.l.b16 %v450
    %v483 = vunpack.c.l.b16 %v451
    %v484 = vunpack.c.l.b16 %v452
    %v485 = vunpack.c.l.b16 %v453
    %v486 = vpack.c.b16 %v471, %v470
    %v487 = vpack.c.b16 %v473, %v472
    %v488 = vpack.c.b16 %v475, %v474
    %v489 = vpack.c.b16 %v477, %v476
    %v490 = vpack.c.b16 %v479, %v478
    %v491 = vpack.c.b16 %v481, %v480
    %v492 = vpack.c.b16 %v483, %v482
    %v493 = vpack.c.b16 %v485, %v484
    %502 = vmatprep.subr.bf16.mxu0 0
    %503 = vmatpush1.bf16.msra.mxu0 %v486
    %504 = vmatprep.subr.bf16.mxu0 0
    %505 = vmatpush1.bf16.msra.mxu0 %v487
    %506 = vmatprep.subr.bf16.mxu0 0
    %507 = vmatpush1.bf16.msra.mxu0 %v488
    %508 = vmatprep.subr.bf16.mxu0 0
    %509 = vmatpush1.bf16.msra.mxu0 %v489
    %510 = vmatprep.subr.bf16.mxu0 0
    %511 = vmatpush1.bf16.msra.mxu0 %v490
    %512 = vmatprep.subr.bf16.mxu0 0
    %513 = vmatpush1.bf16.msra.mxu0 %v491
    %514 = vmatprep.subr.bf16.mxu0 0
    %515 = vmatpush1.bf16.msra.mxu0 %v492
    %516 = vmatprep.subr.bf16.mxu0 0
    %517 = vmatpush1.bf16.msra.mxu0 %v493
    %518 = vmatprep.subr.bf16.mxu0 0
    %519 = vmatpush1.bf16.msra.mxu0 0
    %520 = vmatprep.subr.bf16.mxu0 0
    %521 = vmatpush1.bf16.msra.mxu0 0
    %522 = vmatprep.subr.bf16.mxu0 0
    %523 = vmatpush1.bf16.msra.mxu0 0
    %524 = vmatprep.subr.bf16.mxu0 0
    %525 = vmatpush1.bf16.msra.mxu0 0
    %526 = vmatprep.subr.bf16.mxu0 0
    %527 = vmatpush1.bf16.msra.mxu0 0
    %528 = vmatprep.subr.bf16.mxu0 0
    %529 = vmatpush1.bf16.msra.mxu0 0
    %530 = vmatprep.subr.bf16.mxu0 0
    %531 = vmatpush1.bf16.msra.mxu0 0
    %532 = vmatprep.subr.bf16.mxu0 0
    %533 = vmatpush1.bf16.msra.mxu0 0
    %534 = vmatprep.mubr.bf16.mxu0 0
    %535 = vmatmul.mubr.bf16.gmra.mrb[0].mxu0 %v61
    %v536 = vpop.f32.mrb[0].mxu0
    %v537 = vadd.f32 0.0, %v536
    %v538 = vpop.f32.mrb[0].mxu0
    %v539 = vpop.f32.mrb[0].mxu0
    %v540 = vpop.f32.mrb[0].mxu0
    %541 = vdwg.mxu0
    %v542 = vld [vmem:[%s7] sm:$0x1]
    %v543 = vmul.f32 %v433, %v433
    %544 = vadd.xlane.f32.xlu0 %v543
    %v545 = vpop.xlane.xlu0 %544
    %v546 = vrcp.pop 128.0
    %v547 = vmul.f32 %v545, %v546
    %v548 = vadd.f32 %v547, 1e-06
    %v549 = vrsqrt.pop %v548
    %v550 = vmul.f32 %v433, %v549
    %v552 = vlaneseq
    %v553 = vshrl.u32 %v552, 7
    %v554 = vsub.s32 0, %v553
    %v555 = vrot.slane %v542, %v554
    %v557 = vmul.f32 %v550, %v555
    %v558 = vpack.c.bf16 %v557, %v557
    %v559 = vld [vmem:[%s8] sm:$0xf]
    %v560 = vld [vmem:[%s8 + $0x4] sm:$0xf]
    %v561 = vld [vmem:[%s8 + $0x8] sm:$0xf]
    %v562 = vld [vmem:[%s8 + $0xc] sm:$0xf]
    %v563 = vld [vmem:[%s8 + $0x10] sm:$0xf]
    %v564 = vld [vmem:[%s8 + $0x14] sm:$0xf]
    %v565 = vld [vmem:[%s8 + $0x18] sm:$0xf]
    %v566 = vld [vmem:[%s8 + $0x1c] sm:$0xf]
    %v567 = vld [vmem:[%s8 + $0x20] sm:$0xf]
    %v568 = vld [vmem:[%s8 + $0x24] sm:$0xf]
    %v569 = vld [vmem:[%s8 + $0x28] sm:$0xf]
    %v570 = vld [vmem:[%s8 + $0x2c] sm:$0xf]
    %v571 = vld [vmem:[%s8 + $0x30] sm:$0xf]
    %v572 = vld [vmem:[%s8 + $0x34] sm:$0xf]
    %v573 = vld [vmem:[%s8 + $0x38] sm:$0xf]
    %v574 = vld [vmem:[%s8 + $0x3c] sm:$0xf]
    %v591 = vunpack.c.l.b16 %v559
    %v592 = vunpack.c.l.b16 %v560
    %v593 = vunpack.c.l.b16 %v561
    %v594 = vunpack.c.l.b16 %v562
    %v595 = vunpack.c.l.b16 %v563
    %v596 = vunpack.c.l.b16 %v564
    %v597 = vunpack.c.l.b16 %v565
    %v598 = vunpack.c.l.b16 %v566
    %v599 = vunpack.c.l.b16 %v567
    %v600 = vunpack.c.l.b16 %v568
    %v601 = vunpack.c.l.b16 %v569
    %v602 = vunpack.c.l.b16 %v570
    %v603 = vunpack.c.l.b16 %v571
    %v604 = vunpack.c.l.b16 %v572
    %v605 = vunpack.c.l.b16 %v573
    %v606 = vunpack.c.l.b16 %v574
    %v607 = vpack.c.b16 %v592, %v591
    %v608 = vpack.c.b16 %v594, %v593
    %v609 = vpack.c.b16 %v596, %v595
    %v610 = vpack.c.b16 %v598, %v597
    %v611 = vpack.c.b16 %v600, %v599
    %v612 = vpack.c.b16 %v602, %v601
    %v613 = vpack.c.b16 %v604, %v603
    %v614 = vpack.c.b16 %v606, %v605
    %623 = vmatprep.subr.bf16.mxu0 0
    %624 = vmatpush1.bf16.msra.mxu0 %v607
    %625 = vmatprep.subr.bf16.mxu0 0
    %626 = vmatpush1.bf16.msra.mxu0 %v608
    %627 = vmatprep.subr.bf16.mxu0 0
    %628 = vmatpush1.bf16.msra.mxu0 %v609
    %629 = vmatprep.subr.bf16.mxu0 0
    %630 = vmatpush1.bf16.msra.mxu0 %v610
    %631 = vmatprep.subr.bf16.mxu0 0
    %632 = vmatpush1.bf16.msra.mxu0 %v611
    %633 = vmatprep.subr.bf16.mxu0 0
    %634 = vmatpush1.bf16.msra.mxu0 %v612
    %635 = vmatprep.subr.bf16.mxu0 0
    %636 = vmatpush1.bf16.msra.mxu0 %v613
    %637 = vmatprep.subr.bf16.mxu0 0
    %638 = vmatpush1.bf16.msra.mxu0 %v614
    %639 = vmatprep.subr.bf16.mxu0 0
    %640 = vmatpush1.bf16.msra.mxu0 0
    %641 = vmatprep.subr.bf16.mxu0 0
    %642 = vmatpush1.bf16.msra.mxu0 0
    %643 = vmatprep.subr.bf16.mxu0 0
    %644 = vmatpush1.bf16.msra.mxu0 0
    %645 = vmatprep.subr.bf16.mxu0 0
    %646 = vmatpush1.bf16.msra.mxu0 0
    %647 = vmatprep.subr.bf16.mxu0 0
    %648 = vmatpush1.bf16.msra.mxu0 0
    %649 = vmatprep.subr.bf16.mxu0 0
    %650 = vmatpush1.bf16.msra.mxu0 0
    %651 = vmatprep.subr.bf16.mxu0 0
    %652 = vmatpush1.bf16.msra.mxu0 0
    %653 = vmatprep.subr.bf16.mxu0 0
    %654 = vmatpush1.bf16.msra.mxu0 0
    %655 = vmatprep.mubr.bf16.mxu0 0
    %656 = vmatmul.mubr.bf16.gmra.mrb[0].mxu0 %v558
    %v657 = vpop.f32.mrb[0].mxu0
    %v658 = vadd.f32 0.0, %v657
    %v659 = vpop.f32.mrb[0].mxu0
    %v660 = vpop.f32.mrb[0].mxu0
    %v661 = vpop.f32.mrb[0].mxu0
    %662 = vdwg.mxu0
    %v663 = vpack.c.bf16 %v658, %v658
    %664 = vst [vmem:[%s14] sm:$0xf] %v663
    %v665 = vld [vmem:[%s9] sm:$0xf]
    %v666 = vld [vmem:[%s9 + $0x4] sm:$0xf]
    %v667 = vld [vmem:[%s9 + $0x8] sm:$0xf]
    %v668 = vld [vmem:[%s9 + $0xc] sm:$0xf]
    %v669 = vld [vmem:[%s9 + $0x10] sm:$0xf]
    %v670 = vld [vmem:[%s9 + $0x14] sm:$0xf]
    %v671 = vld [vmem:[%s9 + $0x18] sm:$0xf]
    %v672 = vld [vmem:[%s9 + $0x1c] sm:$0xf]
    %v673 = vld [vmem:[%s9 + $0x20] sm:$0xf]
    %v674 = vld [vmem:[%s9 + $0x24] sm:$0xf]
    %v675 = vld [vmem:[%s9 + $0x28] sm:$0xf]
    %v676 = vld [vmem:[%s9 + $0x2c] sm:$0xf]
    %v677 = vld [vmem:[%s9 + $0x30] sm:$0xf]
    %v678 = vld [vmem:[%s9 + $0x34] sm:$0xf]
    %v679 = vld [vmem:[%s9 + $0x38] sm:$0xf]
    %v680 = vld [vmem:[%s9 + $0x3c] sm:$0xf]
    %v697 = vunpack.c.l.b16 %v665
    %v698 = vunpack.c.l.b16 %v666
    %v699 = vunpack.c.l.b16 %v667
    %v700 = vunpack.c.l.b16 %v668
    %v701 = vunpack.c.l.b16 %v669
    %v702 = vunpack.c.l.b16 %v670
    %v703 = vunpack.c.l.b16 %v671
    %v704 = vunpack.c.l.b16 %v672
    %v705 = vunpack.c.l.b16 %v673
    %v706 = vunpack.c.l.b16 %v674
    %v707 = vunpack.c.l.b16 %v675
    %v708 = vunpack.c.l.b16 %v676
    %v709 = vunpack.c.l.b16 %v677
    %v710 = vunpack.c.l.b16 %v678
    %v711 = vunpack.c.l.b16 %v679
    %v712 = vunpack.c.l.b16 %v680
    %v713 = vpack.c.b16 %v698, %v697
    %v714 = vpack.c.b16 %v700, %v699
    %v715 = vpack.c.b16 %v702, %v701
    %v716 = vpack.c.b16 %v704, %v703
    %v717 = vpack.c.b16 %v706, %v705
    %v718 = vpack.c.b16 %v708, %v707
    %v719 = vpack.c.b16 %v710, %v709
    %v720 = vpack.c.b16 %v712, %v711
    %729 = vmatprep.subr.bf16.mxu0 0
    %730 = vmatpush1.bf16.msra.mxu0 %v713
    %731 = vmatprep.subr.bf16.mxu0 0
    %732 = vmatpush1.bf16.msra.mxu0 %v714
    %733 = vmatprep.subr.bf16.mxu0 0
    %734 = vmatpush1.bf16.msra.mxu0 %v715
    %735 = vmatprep.subr.bf16.mxu0 0
    %736 = vmatpush1.bf16.msra.mxu0 %v716
    %737 = vmatprep.subr.bf16.mxu0 0
    %738 = vmatpush1.bf16.msra.mxu0 %v717
    %739 = vmatprep.subr.bf16.mxu0 0
    %740 = vmatpush1.bf16.msra.mxu0 %v718
    %741 = vmatprep.subr.bf16.mxu0 0
    %742 = vmatpush1.bf16.msra.mxu0 %v719
    %743 = vmatprep.subr.bf16.mxu0 0
    %744 = vmatpush1.bf16.msra.mxu0 %v720
    %745 = vmatprep.subr.bf16.mxu0 0
    %746 = vmatpush1.bf16.msra.mxu0 0
    %747 = vmatprep.subr.bf16.mxu0 0
    %748 = vmatpush1.bf16.msra.mxu0 0
    %749 = vmatprep.subr.bf16.mxu0 0
    %750 = vmatpush1.bf16.msra.mxu0 0
    %751 = vmatprep.subr.bf16.mxu0 0
    %752 = vmatpush1.bf16.msra.mxu0 0
    %753 = vmatprep.subr.bf16.mxu0 0
    %754 = vmatpush1.bf16.msra.mxu0 0
    %755 = vmatprep.subr.bf16.mxu0 0
    %756 = vmatpush1.bf16.msra.mxu0 0
    %757 = vmatprep.subr.bf16.mxu0 0
    %758 = vmatpush1.bf16.msra.mxu0 0
    %759 = vmatprep.subr.bf16.mxu0 0
    %760 = vmatpush1.bf16.msra.mxu0 0
    %761 = vmatprep.mubr.bf16.mxu0 0
    %762 = vmatmul.mubr.bf16.gmra.mrb[0].mxu0 %v558
    %v763 = vpop.f32.mrb[0].mxu0
    %v764 = vadd.f32 0.0, %v763
    %v765 = vpop.f32.mrb[0].mxu0
    %v766 = vpop.f32.mrb[0].mxu0
    %v767 = vpop.f32.mrb[0].mxu0
    %768 = vdwg.mxu0
    %v769 = vpack.c.bf16 %v764, %v764
    %770 = vst [vmem:[%s16] sm:$0xf] %v769
    %v771 = vld [vmem:[%s10] sm:$0xff]
    %v772 = vld [vmem:[%s11] sm:$0xff]
    %v773 = vmul.f32 %v329, %v771
    %775 = vrot.lane.b32.xlu0 %v772, 16
    %v776 = vpop.permute.xlu0 %775
    %v778 = vmul.f32 %v329, %v776
    %780 = vrot.lane.b32.xlu0 %v778, 112
    %v781 = vpop.permute.xlu0 %780
    %v783 = vsub.f32 %v773, %v781
    %785 = vrot.lane.b32.xlu0 %v771, 16
    %v786 = vpop.permute.xlu0 %785
    %v788 = vmul.f32 %v329, %v786
    %v789 = vmul.f32 %v329, %v772
    %791 = vrot.lane.b32.xlu0 %v789, 16
    %v792 = vpop.permute.xlu0 %791
    %v794 = vadd.f32 %v788, %v792
    %vm795 = vcmask 130048
    %v796 = vsel %vm795, %v783, %v794
    %797 = vrot.lane.b32.xlu0 %v771, 32
    %v798 = vpop.permute.xlu0 %797
    %v800 = vmul.f32 %v329, %v798
    %801 = vrot.lane.b32.xlu0 %v772, 48
    %v802 = vpop.permute.xlu0 %801
    %v804 = vmul.f32 %v329, %v802
    %806 = vrot.lane.b32.xlu0 %v804, 112
    %v807 = vpop.permute.xlu0 %806
    %v809 = vsub.f32 %v800, %v807
    %810 = vrot.lane.b32.xlu0 %v771, 48
    %v811 = vpop.permute.xlu0 %810
    %v813 = vmul.f32 %v329, %v811
    %814 = vrot.lane.b32.xlu0 %v772, 32
    %v815 = vpop.permute.xlu0 %814
    %v817 = vmul.f32 %v329, %v815
    %819 = vrot.lane.b32.xlu0 %v817, 16
    %v820 = vpop.permute.xlu0 %819
    %v822 = vadd.f32 %v813, %v820
    %824 = vrot.lane.b32.xlu0 %v809, 96
    %v825 = vpop.permute.xlu0 %824
    %828 = vrot.lane.b32.xlu0 %v822, 96
    %v829 = vpop.permute.xlu0 %828
    %v831 = vsel %vm795, %v825, %v829
    %833 = vrot.lane.b32.xlu0 %v831, 32
    %v834 = vpop.permute.xlu0 %833
    %vm836 = vcmask 261120
    %v837 = vsel %vm836, %v796, %v834
    %v838 = vpack.c.bf16 %v837, %v837
    %vm839 = vcmask 519168
    %840 = vst.msk [vmem:[%s13] sm:$0xf] %vm839, %v838
    %v841 = vmul.f32 %v537, %v771
    %v842 = vmul.f32 %v537, %v776
    %844 = vrot.lane.b32.xlu0 %v842, 112
    %v845 = vpop.permute.xlu0 %844
    %v847 = vsub.f32 %v841, %v845
    %v848 = vmul.f32 %v537, %v786
    %v849 = vmul.f32 %v537, %v772
    %851 = vrot.lane.b32.xlu0 %v849, 16
    %v852 = vpop.permute.xlu0 %851
    %v854 = vadd.f32 %v848, %v852
    %v855 = vsel %vm795, %v847, %v854
    %v856 = vpack.c.bf16 %v855, %v855
    %vm857 = vcmask 257024
    %858 = vst.msk [vmem:[%s15] sm:$0xf] %vm857, %v856
    // Predicated region
    $region54: #{deepseek_v3_mla_forward.2} parent=1 // pred_check
      _
    $region55: #{deepseek_v3_mla_forward.2} parent=1 // pred_check_branch
      %860 = sbr.rel (0) target = $region57
    $region56: #{deepseek_v3_mla_forward.2} parent=1 // pred_region
      _
    $region57: #{deepseek_v3_mla_forward.2} parent=1 // pred_fallthru
      _
    // Predicated region
    $region58: #{deepseek_v3_mla_forward.2} parent=1 // pred_check
      _
    $region59: #{deepseek_v3_mla_forward.2} parent=1 // pred_check_branch
      %862 = sbr.rel (0) target = $region61
    $region60: #{deepseek_v3_mla_forward.2} parent=1 // pred_region
      _
    $region61: #{deepseek_v3_mla_forward.2} parent=1 // pred_fallthru
      _
    // Predicated region
    $region62: #{deepseek_v3_mla_forward.2} parent=1 // pred_check
      _
    $region63: #{deepseek_v3_mla_forward.2} parent=1 // pred_check_branch
      %864 = sbr.rel (0) target = $region65
    $region64: #{deepseek_v3_mla_forward.2} parent=1 // pred_region
      _
    $region65: #{deepseek_v3_mla_forward.2} parent=1 // pred_fallthru
      _
    // Predicated region
    $region66: #{deepseek_v3_mla_forward.2} parent=1 // pred_check
      _
    $region67: #{deepseek_v3_mla_forward.2} parent=1 // pred_check_branch
      %866 = sbr.rel (0) target = $region69
    $region68: #{deepseek_v3_mla_forward.2} parent=1 // pred_region
      _
    $region69: #{deepseek_v3_mla_forward.2} parent=1 // pred_fallthru
      _
    // Predicated region
    $region70: #{deepseek_v3_mla_forward.2} parent=1 // pred_check
      _
    $region71: #{deepseek_v3_mla_forward.2} parent=1 // pred_check_branch
      %868 = sbr.rel (0) target = $region73
    $region72: #{deepseek_v3_mla_forward.2} parent=1 // pred_region
      _
    $region73: #{deepseek_v3_mla_forward.2} parent=1 // pred_fallthru
      _
    // Predicated region
    $region74: #{deepseek_v3_mla_forward.2} parent=1 // pred_check
      _
    $region75: #{deepseek_v3_mla_forward.2} parent=1 // pred_check_branch
      %870 = sbr.rel (0) target = $region77
    $region76: #{deepseek_v3_mla_forward.2} parent=1 // pred_region
      _
    $region77: #{deepseek_v3_mla_forward.2} parent=1 // pred_fallthru
      _
    // Predicated region
    $region78: #{deepseek_v3_mla_forward.2} parent=1 // pred_check
      _
    $region79: #{deepseek_v3_mla_forward.2} parent=1 // pred_check_branch
      %872 = sbr.rel (0) target = $region81
    $region80: #{deepseek_v3_mla_forward.2} parent=1 // pred_region
      _
    $region81: #{deepseek_v3_mla_forward.2} parent=1 // pred_fallthru
      _
    // Predicated region
    $region82: #{deepseek_v3_mla_forward.2} parent=1 // pred_check
      _
    $region83: #{deepseek_v3_mla_forward.2} parent=1 // pred_check_branch
      %874 = sbr.rel (0) target = $region85
    $region84: #{deepseek_v3_mla_forward.2} parent=1 // pred_region
      _
    $region85: #{deepseek_v3_mla_forward.2} parent=1 // pred_fallthru
      _
    // Predicated region
    $region86: #{deepseek_v3_mla_forward.2} parent=1 // pred_check
      _
    $region87: #{deepseek_v3_mla_forward.2} parent=1 // pred_check_branch
      %876 = sbr.rel (0) target = $region89
    $region88: #{deepseek_v3_mla_forward.2} parent=1 // pred_region
      _
    $region89: #{deepseek_v3_mla_forward.2} parent=1 // pred_fallthru
      _
    // Predicated region
    $region90: #{deepseek_v3_mla_forward.2} parent=1 // pred_check
      _
    $region91: #{deepseek_v3_mla_forward.2} parent=1 // pred_check_branch
      %878 = sbr.rel (0) target = $region93
    $region92: #{deepseek_v3_mla_forward.2} parent=1 // pred_region
      _
    $region93: #{deepseek_v3_mla_forward.2} parent=1 // pred_fallthru
      _
    %879 = vsyncpa [#allocation3], 1

</llo_original>
